<compile_context>
chip_gen: v6e
topology: v6e:2x2x1
jax: 0.10.0
libtpu: 0.0.40
codegen_flags: <defaults>
</compile_context>

<pallas_src>
import functools

import jax
import jax.numpy as jnp
from jax import lax
from jax.experimental import pallas as pl
from jax.experimental.pallas import tpu as pltpu


def attention_block_kernel(x_ref, wqkv_ref, wo_ref, mask_ref, o_ref,
                           qkv_ref, acc_ref, *, num_heads, eps):
    """One grid step == `bb` batch elements. Dense matmuls use M = bb*S rows."""
    bb, S, E = x_ref.shape
    D = E // num_heads
    M = bb * S

    # --- LayerNorm (weight folded into W_qkv in the wrapper; module has no LN
    # or attention biases).  Elementwise math stays f32: v5e VPU/EUP lack bf16.
    x = x_ref[...].astype(jnp.float32).reshape(M, E)
    mean = jnp.mean(x, axis=-1, keepdims=True)
    xc = x - mean
    var = jnp.mean(xc * xc, axis=-1, keepdims=True)
    xn = xc * lax.rsqrt(var + eps)
    # `x` is not referenced again: the residual re-reads x_ref at the end, so
    # the (M, E) f32 value does not stay live across the attention loop.

    # --- fused QKV projection: one MXU matmul (bf16 operands, f32 accumulate).
    # Weight is pre-transposed with 1/sqrt(D) and ln_w folded in.  Result goes
    # to a VMEM scratch so the attention loop re-loads per-head slices instead
    # of holding the whole (M, 3E) value in vregs.
    qkv_ref[...] = jnp.dot(
        xn.astype(jnp.bfloat16), wqkv_ref[...],
        preferred_element_type=jnp.float32).astype(jnp.bfloat16)

    mask = mask_ref[...]                      # (S, S) f32 additive causal mask

    # --- attention: fori_loop over batch elements of this block (bounds live
    # ranges when bb grows), static loop over heads (static 128-lane-aligned
    # slices), softmax batched over all heads of the batch element at once.
    def batch_body(b, carry):
        r0 = pl.multiple_of(b * S, S)         # bf16 sublane-pack aligned rows

        def q_sl(h):
            return qkv_ref[pl.ds(r0, S), pl.ds(h * D, D)]

        def k_sl(h):
            return qkv_ref[pl.ds(r0, S), pl.ds(E + h * D, D)]

        def v_sl(h):
            return qkv_ref[pl.ds(r0, S), pl.ds(2 * E + h * D, D)]

        # Scores: contract over D on both operands so this lowers as a
        # transposed-RHS MXU matmul (no kh.T / XLU transpose; if a vxpose ever
        # shows up in the bundle dump, switch to pl.dot(qh, kh, trans_b=True)).
        scores = jnp.stack(
            [lax.dot_general(q_sl(h), k_sl(h), (((1,), (1,)), ((), ())),
                             preferred_element_type=jnp.float32)
             for h in range(num_heads)], axis=0)             # (H, S, S) f32

        # Batched masked softmax over all H heads (f32).  Every causal row
        # contains its diagonal, so no fully -inf row -> no 0 * inf NaNs.
        s = scores + mask[None, :, :]
        m = jnp.max(s, axis=-1, keepdims=True)
        p = jnp.exp(s - m)
        p = p * pl.reciprocal(jnp.sum(p, axis=-1, keepdims=True), approx=True)
        p = p.astype(jnp.bfloat16)

        for h in range(num_heads):
            acc_ref[pl.ds(r0, S), pl.ds(h * D, D)] = jnp.dot(
                p[h], v_sl(h),
                preferred_element_type=jnp.float32).astype(jnp.bfloat16)
        return carry

    lax.fori_loop(0, bb, batch_body, None, unroll=bb <= 4)

    # --- output projection (pre-transposed W_out) + residual (re-read x_ref).
    out = jnp.dot(acc_ref[...], wo_ref[...], preferred_element_type=jnp.float32)
    o_ref[...] = (out.reshape(bb, S, E)
                  + x_ref[...].astype(jnp.float32)).astype(o_ref.dtype)


def _default_batch_block(B, S, target_rows=256):
    """Rows-per-grid-step: keep >= 2 grid steps (v7x megacore + DMA/compute
    pipelining) and, when B allows, bb*S >= 256 (v6e/v7x MXU M-fill; >= 128
    already fills v5e's 4x128^2 MXU)."""
    divisors = [d for d in range(1, B + 1) if B % d == 0]
    good = [d for d in divisors if B // d >= 2 and d * S >= target_rows]
    if good:
        return min(good)                     # smallest bb hitting the target
    two_step = [d for d in divisors if B // d >= 2]
    if two_step:
        return max(two_step)                 # best M-fill with grid >= 2
    return B                                 # B == 1: nothing to shard


def attention_block(x, ln_w, in_proj_w, out_proj_w, scaler, *, num_heads,
                    eps=1e-5, batch_block=None):
    B, S, E = x.shape
    assert E % num_heads == 0
    D = E // num_heads
    # Alignment prerequisites for static head slices and the bf16 scratches
    # sliced at b*S row offsets (otherwise slices become masked/relayout ops).
    assert D % 128 == 0, f"head_dim {D} must be a multiple of 128 lanes"
    assert S % 16 == 0, f"seq_len {S} must be a multiple of the bf16 sublane pack (16)"

    if batch_block is None:
        batch_block = _default_batch_block(B, S)
    bb = batch_block
    assert B % bb == 0

    # One-time weight prep (cheap XLA ops outside the hot kernel):
    #  * fold attention scale 1/sqrt(D) into W_q
    #  * fuse Q/K/V weights into a single (E, 3E) operand, pre-transposed
    #  * fold the LayerNorm weight (per input feature) into the fused weight
    #  * cast matmul weights to bf16 (f32 accumulation is kept in-kernel)
    scale = 1.0 / jnp.sqrt(jnp.float32(D))
    wq = in_proj_w[:E] * scale
    wk = in_proj_w[E:2 * E]
    wv = in_proj_w[2 * E:]
    w_qkv = jnp.concatenate([wq, wk, wv], axis=0).T                 # (E, 3E)
    w_qkv = (ln_w.astype(jnp.float32)[:, None] * w_qkv).astype(jnp.bfloat16)
    w_out_t = out_proj_w.T.astype(jnp.bfloat16)                     # (E, E)

    # Linear-encoding causal mask is batch-invariant -> build once here.
    sp = jax.nn.softplus(100.0 * scaler.astype(jnp.float32))
    idx = jnp.arange(S, dtype=jnp.float32)
    base = idx[None, :] - idx[:, None]                              # j - i
    causal = idx[None, :] <= idx[:, None]
    mask = jnp.where(causal, sp * base, -jnp.inf).astype(jnp.float32)

    kernel = functools.partial(attention_block_kernel, num_heads=num_heads, eps=eps)
    return pl.pallas_call(
        kernel,
        out_shape=jax.ShapeDtypeStruct((B, S, E), x.dtype),
        grid=(B // bb,),
        in_specs=[
            pl.BlockSpec((bb, S, E), lambda b: (b, 0, 0)),   # x (LN input + residual)
            pl.BlockSpec((E, 3 * E), lambda b: (0, 0)),      # fused W_qkv (ln_w, 1/sqrt(D) folded, transposed)
            pl.BlockSpec((E, E), lambda b: (0, 0)),          # transposed W_out
            pl.BlockSpec((S, S), lambda b: (0, 0)),          # additive attn mask
        ],
        out_specs=pl.BlockSpec((bb, S, E), lambda b: (b, 0, 0)),
        scratch_shapes=[
            pltpu.VMEM((bb * S, 3 * E), jnp.bfloat16),       # QKV projection result
            pltpu.VMEM((bb * S, E), jnp.bfloat16),           # per-head attn outputs
        ],
        # "parallel": no state carried across batch steps -> both v7x TCs get
        # work now that the default grid has >= 2 steps.  Weight/mask blocks
        # have constant index_maps so they are not re-DMA'd per step; at E=384
        # their double-buffered footprint (~2.3 MiB) is noise, but budget
        # against v7x's 64 MiB physical / 32 MiB scoped VMEM if E or bb scales
        # (single-buffer them via pipeline_mode=pl.Buffered(1) at that point).
        compiler_params=pltpu.CompilerParams(
            dimension_semantics=("parallel",),
            vmem_limit_bytes=32 * 1024 * 1024),
    )(x, w_qkv, w_out_t, mask)


def reference(x, ln_w, in_proj_w, out_proj_w, scaler, *, num_heads, eps=1e-5):
    """Pure-JAX f32 reference mirroring the PyTorch forward."""
    B, S, E = x.shape
    D = E // num_heads
    mean = jnp.mean(x, -1, keepdims=True)
    var = jnp.mean((x - mean) ** 2, -1, keepdims=True)
    xn = (x - mean) / jnp.sqrt(var + eps) * ln_w
    wq, wk, wv = in_proj_w[:E], in_proj_w[E:2 * E], in_proj_w[2 * E:]
    q = (xn @ wq.T).reshape(B, S, num_heads, D)
    k = (xn @ wk.T).reshape(B, S, num_heads, D)
    v = (xn @ wv.T).reshape(B, S, num_heads, D)
    idx = jnp.arange(S, dtype=jnp.float32)
    base = idx[None, :] - idx[:, None]
    causal = idx[None, :] <= idx[:, None]
    mask = jnp.where(causal, jax.nn.softplus(100.0 * scaler) * base, -jnp.inf)
    s = jnp.einsum("bqhd,bkhd->bhqk", q, k) / jnp.sqrt(jnp.float32(D)) + mask
    p = jax.nn.softmax(s, axis=-1)
    o = jnp.einsum("bhqk,bkhd->bqhd", p, v).reshape(B, S, E)
    return o @ out_proj_w.T + x


if __name__ == "__main__":
    # Module-consistent small shapes: residual_depth E=384, num_heads=3 -> D=128.
    B, S, E, H = 2, 16, 384, 3

    key = jax.random.PRNGKey(0)
    k_x, k_in, k_out = jax.random.split(key, 3)
    x = jax.random.normal(k_x, (B, S, E), dtype=jnp.float32)
    ln_w = jnp.ones((E,), jnp.float32)                                   # LayerNorm init
    in_proj_w = 0.02 * jax.random.normal(k_in, (3 * E, E), jnp.float32)  # MHA in_proj (no bias)
    out_proj_w = 0.02 * jax.random.normal(k_out, (E, E), jnp.float32)    # MHA out_proj (no bias)
    scaler = jnp.asarray(1.0 / 100.0, jnp.float32)                       # 1 / lr_mult

    out = attention_block(x, ln_w, in_proj_w, out_proj_w, scaler, num_heads=H)
    out = jax.block_until_ready(out)

    ref = reference(x, ln_w, in_proj_w, out_proj_w, scaler, num_heads=H)
    # bf16 matmul operands (f32 accumulation) + approx EUP reciprocal vs. an
    # f32 reference: observed error ~1e-3; tolerance tightened from 2e-2.
    err = float(jnp.max(jnp.abs(out - ref)))
    assert err < 1e-2, err
    print("KERNEL_OK")
</pallas_src>

<mosaic_0001>
module attributes {stable_mosaic.version = 11 : i64} {
  func.func @attention_block_kernel(%arg0: i32, %arg1: memref<1x16x384xf32, #tpu.memory_space<vmem>>, %arg2: memref<384x1152xbf16, #tpu.memory_space<vmem>>, %arg3: memref<384x384xbf16, #tpu.memory_space<vmem>>, %arg4: memref<16x16xf32, #tpu.memory_space<vmem>>, %arg5: memref<1x16x384xf32, #tpu.memory_space<vmem>>, %arg6: memref<16x1152xbf16, #tpu.memory_space<vmem>>, %arg7: memref<16x384xbf16, #tpu.memory_space<vmem>>) attributes {dimension_semantics = [#tpu.dimension_semantics<parallel>], iteration_bounds = array<i64: 2>, scalar_prefetch = 0 : i64, scratch_operands = 2 : i64, tpu.core_type = #tpu.core_type<tc>, window_params = [{transform_indices = @transform_0, window_bounds = array<i64: 1, 16, 384>}, {pipeline_mode = #tpu.pipeline_mode<synchronous>, transform_indices = @transform_1, window_bounds = array<i64: 384, 1152>}, {pipeline_mode = #tpu.pipeline_mode<synchronous>, transform_indices = @transform_2, window_bounds = array<i64: 384, 384>}, {pipeline_mode = #tpu.pipeline_mode<synchronous>, transform_indices = @transform_3, window_bounds = array<i64: 16, 16>}, {transform_indices = @transform_4, window_bounds = array<i64: 1, 16, 384>}]} {
    %c0 = arith.constant 0 : index
    %c0_0 = arith.constant 0 : index
    %c0_1 = arith.constant 0 : index
    %0 = vector.load %arg1[%c0, %c0_0, %c0_1] : memref<1x16x384xf32, #tpu.memory_space<vmem>>, vector<1x16x384xf32>
    %1 = vector.shape_cast %0 : vector<1x16x384xf32> to vector<16x384xf32>
    %cst = arith.constant dense<0.000000e+00> : vector<16xf32>
    %2 = vector.multi_reduction <add>, %1, %cst [1] : vector<16x384xf32> to vector<16xf32>
    %3 = vector.shape_cast %2 : vector<16xf32> to vector<16x1xf32>
    %cst_2 = arith.constant 3.840000e+02 : f32
    %4 = vector.broadcast %cst_2 : f32 to vector<16x1xf32>
    %5 = arith.divf %3, %4 : vector<16x1xf32>
    %6 = vector.broadcast %5 : vector<16x1xf32> to vector<16x384xf32>
    %7 = arith.subf %1, %6 : vector<16x384xf32>
    %8 = arith.mulf %7, %7 : vector<16x384xf32>
    %cst_3 = arith.constant dense<0.000000e+00> : vector<16xf32>
    %9 = vector.multi_reduction <add>, %8, %cst_3 [1] : vector<16x384xf32> to vector<16xf32>
    %10 = vector.shape_cast %9 : vector<16xf32> to vector<16x1xf32>
    %cst_4 = arith.constant 3.840000e+02 : f32
    %11 = vector.broadcast %cst_4 : f32 to vector<16x1xf32>
    %12 = arith.divf %10, %11 : vector<16x1xf32>
    %cst_5 = arith.constant 9.99999974E-6 : f32
    %13 = vector.broadcast %cst_5 : f32 to vector<16x1xf32>
    %14 = arith.addf %12, %13 : vector<16x1xf32>
    %15 = math.rsqrt %14 : vector<16x1xf32>
    %16 = vector.broadcast %15 : vector<16x1xf32> to vector<16x384xf32>
    %17 = arith.mulf %7, %16 : vector<16x384xf32>
    %18 = arith.truncf %17 : vector<16x384xf32> to vector<16x384xbf16>
    %c0_6 = arith.constant 0 : index
    %c0_7 = arith.constant 0 : index
    %19 = vector.load %arg2[%c0_6, %c0_7] : memref<384x1152xbf16, #tpu.memory_space<vmem>>, vector<384x1152xbf16>
    %cst_8 = arith.constant dense<0.000000e+00> : vector<16x1152xf32>
    %20 = tpu.matmul %18, %19, %cst_8 {dimension_numbers = #tpu.dot_dimension_numbers<[1], [0], [0], [1], [0, 0, 1, 1], [], []>} : vector<16x384xbf16>, vector<384x1152xbf16>, vector<16x1152xf32> -> vector<16x1152xf32>
    %21 = arith.truncf %20 : vector<16x1152xf32> to vector<16x1152xbf16>
    %c0_9 = arith.constant 0 : index
    %c0_10 = arith.constant 0 : index
    %22 = vector.load %arg6[%c0_9, %c0_10] : memref<16x1152xbf16, #tpu.memory_space<vmem>>, vector<16x1152xbf16>
    tpu.vector_store %arg6[%c0_9, %c0_10], %21 {strides = array<i32>} : memref<16x1152xbf16, #tpu.memory_space<vmem>>, vector<16x1152xbf16>,
    %c0_11 = arith.constant 0 : index
    %c0_12 = arith.constant 0 : index
    %23 = vector.load %arg4[%c0_11, %c0_12] : memref<16x16xf32, #tpu.memory_space<vmem>>, vector<16x16xf32>
    %c0_i32 = arith.constant 0 : i32
    %c16_i32 = arith.constant 16 : i32
    %24 = arith.muli %c0_i32, %c16_i32 : i32
    %25 = tpu.assume_multiple %24, 16 : i32
    %26 = arith.index_cast %25 : i32 to index
    %c0_13 = arith.constant 0 : index
    %27 = vector.load %arg6[%26, %c0_13] : memref<16x1152xbf16, #tpu.memory_space<vmem>>, vector<16x128xbf16>
    %28 = arith.index_cast %25 : i32 to index
    %c384 = arith.constant 384 : index
    %29 = vector.load %arg6[%28, %c384] : memref<16x1152xbf16, #tpu.memory_space<vmem>>, vector<16x128xbf16>
    %cst_14 = arith.constant dense<0.000000e+00> : vector<16x16xf32>
    %30 = tpu.matmul %27, %29, %cst_14 {dimension_numbers = #tpu.dot_dimension_numbers<[1], [1], [0], [0], [0, 0, 1, 0], [], []>} : vector<16x128xbf16>, vector<16x128xbf16>, vector<16x16xf32> -> vector<16x16xf32>
    %31 = arith.index_cast %25 : i32 to index
    %c128 = arith.constant 128 : index
    %32 = vector.load %arg6[%31, %c128] : memref<16x1152xbf16, #tpu.memory_space<vmem>>, vector<16x128xbf16>
    %33 = arith.index_cast %25 : i32 to index
    %c512 = arith.constant 512 : index
    %34 = vector.load %arg6[%33, %c512] : memref<16x1152xbf16, #tpu.memory_space<vmem>>, vector<16x128xbf16>
    %cst_15 = arith.constant dense<0.000000e+00> : vector<16x16xf32>
    %35 = tpu.matmul %32, %34, %cst_15 {dimension_numbers = #tpu.dot_dimension_numbers<[1], [1], [0], [0], [0, 0, 1, 0], [], []>} : vector<16x128xbf16>, vector<16x128xbf16>, vector<16x16xf32> -> vector<16x16xf32>
    %36 = arith.index_cast %25 : i32 to index
    %c256 = arith.constant 256 : index
    %37 = vector.load %arg6[%36, %c256] : memref<16x1152xbf16, #tpu.memory_space<vmem>>, vector<16x128xbf16>
    %38 = arith.index_cast %25 : i32 to index
    %c640 = arith.constant 640 : index
    %39 = vector.load %arg6[%38, %c640] : memref<16x1152xbf16, #tpu.memory_space<vmem>>, vector<16x128xbf16>
    %cst_16 = arith.constant dense<0.000000e+00> : vector<16x16xf32>
    %40 = tpu.matmul %37, %39, %cst_16 {dimension_numbers = #tpu.dot_dimension_numbers<[1], [1], [0], [0], [0, 0, 1, 0], [], []>} : vector<16x128xbf16>, vector<16x128xbf16>, vector<16x16xf32> -> vector<16x16xf32>
    %41 = vector.shape_cast %30 : vector<16x16xf32> to vector<1x16x16xf32>
    %42 = vector.shape_cast %35 : vector<16x16xf32> to vector<1x16x16xf32>
    %43 = vector.shape_cast %40 : vector<16x16xf32> to vector<1x16x16xf32>
    %44 = tpu.concatenate %41, %42, %43 in 0 : vector<1x16x16xf32>, vector<1x16x16xf32>, vector<1x16x16xf32> -> vector<3x16x16xf32>
    %45 = vector.shape_cast %23 : vector<16x16xf32> to vector<1x16x16xf32>
    %46 = vector.broadcast %45 : vector<1x16x16xf32> to vector<3x16x16xf32>
    %47 = arith.addf %44, %46 : vector<3x16x16xf32>
    %cst_17 = arith.constant dense<0xFF800000> : vector<3x16xf32>
    %48 = vector.multi_reduction <maximumf>, %47, %cst_17 [2] : vector<3x16x16xf32> to vector<3x16xf32>
    %49 = vector.shape_cast %48 : vector<3x16xf32> to vector<3x16x1xf32>
    %50 = vector.broadcast %49 : vector<3x16x1xf32> to vector<3x16x16xf32>
    %51 = arith.subf %47, %50 : vector<3x16x16xf32>
    %52 = math.exp %51 : vector<3x16x16xf32>
    %cst_18 = arith.constant dense<0.000000e+00> : vector<3x16xf32>
    %53 = vector.multi_reduction <add>, %52, %cst_18 [2] : vector<3x16x16xf32> to vector<3x16xf32>
    %54 = vector.shape_cast %53 : vector<3x16xf32> to vector<3x16x1xf32>
    %55 = tpu.reciprocal %54 {approx = true} : vector<3x16x1xf32> -> vector<3x16x1xf32>
    %56 = vector.broadcast %55 : vector<3x16x1xf32> to vector<3x16x16xf32>
    %57 = arith.mulf %52, %56 : vector<3x16x16xf32>
    %58 = arith.truncf %57 : vector<3x16x16xf32> to vector<3x16x16xbf16>
    %59 = vector.extract_strided_slice %58 {offsets = [0, 0, 0], sizes = [1, 16, 16], strides = [1, 1, 1]} : vector<3x16x16xbf16> to vector<1x16x16xbf16>
    %60 = vector.shape_cast %59 : vector<1x16x16xbf16> to vector<16x16xbf16>
    %61 = arith.index_cast %25 : i32 to index
    %c768 = arith.constant 768 : index
    %62 = vector.load %arg6[%61, %c768] : memref<16x1152xbf16, #tpu.memory_space<vmem>>, vector<16x128xbf16>
    %cst_19 = arith.constant dense<0.000000e+00> : vector<16x128xf32>
    %63 = tpu.matmul %60, %62, %cst_19 {dimension_numbers = #tpu.dot_dimension_numbers<[1], [0], [0], [1], [0, 0, 1, 1], [], []>} : vector<16x16xbf16>, vector<16x128xbf16>, vector<16x128xf32> -> vector<16x128xf32>
    %64 = arith.truncf %63 : vector<16x128xf32> to vector<16x128xbf16>
    %65 = arith.index_cast %25 : i32 to index
    %c0_20 = arith.constant 0 : index
    %66 = vector.load %arg7[%65, %c0_20] : memref<16x384xbf16, #tpu.memory_space<vmem>>, vector<16x128xbf16>
    tpu.vector_store %arg7[%65, %c0_20], %64 {strides = array<i32>} : memref<16x384xbf16, #tpu.memory_space<vmem>>, vector<16x128xbf16>,
    %67 = vector.extract_strided_slice %58 {offsets = [1, 0, 0], sizes = [1, 16, 16], strides = [1, 1, 1]} : vector<3x16x16xbf16> to vector<1x16x16xbf16>
    %68 = vector.shape_cast %67 : vector<1x16x16xbf16> to vector<16x16xbf16>
    %69 = arith.index_cast %25 : i32 to index
    %c896 = arith.constant 896 : index
    %70 = vector.load %arg6[%69, %c896] : memref<16x1152xbf16, #tpu.memory_space<vmem>>, vector<16x128xbf16>
    %cst_21 = arith.constant dense<0.000000e+00> : vector<16x128xf32>
    %71 = tpu.matmul %68, %70, %cst_21 {dimension_numbers = #tpu.dot_dimension_numbers<[1], [0], [0], [1], [0, 0, 1, 1], [], []>} : vector<16x16xbf16>, vector<16x128xbf16>, vector<16x128xf32> -> vector<16x128xf32>
    %72 = arith.truncf %71 : vector<16x128xf32> to vector<16x128xbf16>
    %73 = arith.index_cast %25 : i32 to index
    %c128_22 = arith.constant 128 : index
    %74 = vector.load %arg7[%73, %c128_22] : memref<16x384xbf16, #tpu.memory_space<vmem>>, vector<16x128xbf16>
    tpu.vector_store %arg7[%73, %c128_22], %72 {strides = array<i32>} : memref<16x384xbf16, #tpu.memory_space<vmem>>, vector<16x128xbf16>,
    %75 = vector.extract_strided_slice %58 {offsets = [2, 0, 0], sizes = [1, 16, 16], strides = [1, 1, 1]} : vector<3x16x16xbf16> to vector<1x16x16xbf16>
    %76 = vector.shape_cast %75 : vector<1x16x16xbf16> to vector<16x16xbf16>
    %77 = arith.index_cast %25 : i32 to index
    %c1024 = arith.constant 1024 : index
    %78 = vector.load %arg6[%77, %c1024] : memref<16x1152xbf16, #tpu.memory_space<vmem>>, vector<16x128xbf16>
    %cst_23 = arith.constant dense<0.000000e+00> : vector<16x128xf32>
    %79 = tpu.matmul %76, %78, %cst_23 {dimension_numbers = #tpu.dot_dimension_numbers<[1], [0], [0], [1], [0, 0, 1, 1], [], []>} : vector<16x16xbf16>, vector<16x128xbf16>, vector<16x128xf32> -> vector<16x128xf32>
    %80 = arith.truncf %79 : vector<16x128xf32> to vector<16x128xbf16>
    %81 = arith.index_cast %25 : i32 to index
    %c256_24 = arith.constant 256 : index
    %82 = vector.load %arg7[%81, %c256_24] : memref<16x384xbf16, #tpu.memory_space<vmem>>, vector<16x128xbf16>
    tpu.vector_store %arg7[%81, %c256_24], %80 {strides = array<i32>} : memref<16x384xbf16, #tpu.memory_space<vmem>>, vector<16x128xbf16>,
    %c1_i32 = arith.constant 1 : i32
    %c0_25 = arith.constant 0 : index
    %c0_26 = arith.constant 0 : index
    %83 = vector.load %arg7[%c0_25, %c0_26] : memref<16x384xbf16, #tpu.memory_space<vmem>>, vector<16x384xbf16>
    %c0_27 = arith.constant 0 : index
    %c0_28 = arith.constant 0 : index
    %84 = vector.load %arg3[%c0_27, %c0_28] : memref<384x384xbf16, #tpu.memory_space<vmem>>, vector<384x384xbf16>
    %cst_29 = arith.constant dense<0.000000e+00> : vector<16x384xf32>
    %85 = tpu.matmul %83, %84, %cst_29 {dimension_numbers = #tpu.dot_dimension_numbers<[1], [0], [0], [1], [0, 0, 1, 1], [], []>} : vector<16x384xbf16>, vector<384x384xbf16>, vector<16x384xf32> -> vector<16x384xf32>
    %86 = vector.shape_cast %85 : vector<16x384xf32> to vector<1x16x384xf32>
    %c0_30 = arith.constant 0 : index
    %c0_31 = arith.constant 0 : index
    %c0_32 = arith.constant 0 : index
    %87 = vector.load %arg1[%c0_30, %c0_31, %c0_32] : memref<1x16x384xf32, #tpu.memory_space<vmem>>, vector<1x16x384xf32>
    %88 = arith.addf %86, %87 : vector<1x16x384xf32>
    %c0_33 = arith.constant 0 : index
    %c0_34 = arith.constant 0 : index
    %c0_35 = arith.constant 0 : index
    %89 = vector.load %arg5[%c0_33, %c0_34, %c0_35] : memref<1x16x384xf32, #tpu.memory_space<vmem>>, vector<1x16x384xf32>
    tpu.vector_store %arg5[%c0_33, %c0_34, %c0_35], %88 {strides = array<i32>} : memref<1x16x384xf32, #tpu.memory_space<vmem>>, vector<1x16x384xf32>,
    return
  }
  func.func @transform_0(%arg0: i32) -> (i32, i32, i32) {
    %c0_i32 = arith.constant 0 : i32
    %c0_i32_0 = arith.constant 0 : i32
    %c0_i32_1 = arith.constant 0 : i32
    return %arg0, %c0_i32, %c0_i32_0 : i32, i32, i32
  }
  func.func @transform_1(%arg0: i32) -> (i32, i32) {
    %c0_i32 = arith.constant 0 : i32
    %c0_i32_0 = arith.constant 0 : i32
    %c0_i32_1 = arith.constant 0 : i32
    return %c0_i32, %c0_i32_0 : i32, i32
  }
  func.func @transform_2(%arg0: i32) -> (i32, i32) {
    %c0_i32 = arith.constant 0 : i32
    %c0_i32_0 = arith.constant 0 : i32
    %c0_i32_1 = arith.constant 0 : i32
    return %c0_i32, %c0_i32_0 : i32, i32
  }
  func.func @transform_3(%arg0: i32) -> (i32, i32) {
    %c0_i32 = arith.constant 0 : i32
    %c0_i32_0 = arith.constant 0 : i32
    %c0_i32_1 = arith.constant 0 : i32
    return %c0_i32, %c0_i32_0 : i32, i32
  }
  func.func @transform_4(%arg0: i32) -> (i32, i32, i32) {
    %c0_i32 = arith.constant 0 : i32
    %c0_i32_0 = arith.constant 0 : i32
    %c0_i32_1 = arith.constant 0 : i32
    return %arg0, %c0_i32, %c0_i32_0 : i32, i32, i32
  }
}

</mosaic_0001>

<llo_original>
// kernel: tpu_custom_call.1
$region0: #{tpu_custom_call.1}
  #allocation0 [shape = 'u32[]', space=smem, size = 0x4, offset = 0x4, fixed_abs, tag = 'smem constant byte address 0x4 - core index']
  #allocation1 [shape = 'u32[144,128]{1,0:T(1,128)}', space=vmem, size = 0x12000, scoped, tag = 'internal scratch']
  #allocation2 [shape = 'bf16[16,1152]{1,0:T(8,128)(2,1)}', space=vmem, size = 0x9000, scoped, tag = 'scratch operand']
  #allocation3 [shape = 'bf16[16,384]{1,0:T(8,128)(2,1)}', space=vmem, size = 0x3000, scoped, tag = 'scratch operand']
  %s0 = inlined_call_operand.hbm [shape: f32[2,16,384], index: 0, kind: input, shape index: {}]
  %s1 = inlined_call_operand.hbm [shape: bf16[384,1152], index: 1, kind: input, shape index: {}]
  %s2 = inlined_call_operand.hbm [shape: bf16[384,384], index: 2, kind: input, shape index: {}]
  %s3 = inlined_call_operand.hbm [shape: f32[16,16], index: 3, kind: input, shape index: {}]
  %s4 = inlined_call_operand.hbm [shape: f32[2,16,384], index: 4, kind: output, shape index: {}]
  %s5 = sld [smem:[#allocation0]]
  $region65: #{tpu_custom_call.1} parent=0
    _
  %s7 = ssub.s32 1, %s5
  %s8 = scalar_select 0, %s7, %s5
  $region1: #{tpu_custom_call.1} parent=0
    #allocation4 [shape = 'u8[49152]{0}', space=vmem, size = 0xc000, scoped, tag = 'input window, operand 0']
    #allocation5 [shape = 's32[2]{0}', space=sflag, size = 0x8, scoped, tag = 'scoped memory for tpu_custom_call.1']
    #allocation6 [shape = 's32[2]{0}', space=sflag, size = 0x8, scoped, tag = 'scoped memory for tpu_custom_call.1']
    #allocation7 [shape = 'u8[884736]{0}', space=vmem, size = 0xd8000, scoped, tag = 'input window, operand 1, single buffered']
    #allocation8 [shape = 's32[1]{0}', space=sflag, size = 0x4, scoped, tag = 'scoped memory for tpu_custom_call.1']
    #allocation9 [shape = 'u8[294912]{0}', space=vmem, size = 0x48000, scoped, tag = 'input window, operand 2, single buffered']
    #allocation10 [shape = 'u8[8192]{0}', space=vmem, size = 0x2000, scoped, tag = 'input window, operand 3, single buffered']
    #allocation11 [shape = 's32[1]{0}', space=sflag, size = 0x4, scoped, tag = 'scoped memory for tpu_custom_call.1']
    #allocation12 [shape = 'u8[49152]{0}', space=vmem, size = 0xc000, scoped, tag = 'output window, operand 0']
    %9 = vsyncpa [#allocation5], 0
    %s10 = scalar_lea.sflag [#allocation5], 1
    %11 = vsyncpa %s10, 0
    %12 = vsyncpa [#allocation8], 0
    %13 = vsyncpa [#allocation11], 0
    %14 = vsyncpa [#allocation6], 0
    %s15 = scalar_lea.sflag [#allocation6], 1
    %16 = vsyncpa %s15, 0
    loop: start=0, step=1, limit=4
    $region2: #{tpu_custom_call.1} parent=1 // loop_pre_header
      _
    $region3: #{tpu_custom_call.1} parent=1 // loop_header
      %s18 = sphi 0, %s22
      %p19 = scmp.ge.s32.totalorder %s18, 4
      %s28 = sphi 0, %s30
      %s31 = sphi 0, %s28
      %s32 = sphi 0, %s31
      %s48 = sphi 0, %s32
      %s52 = sphi 0, %s52
      %s54 = sphi 0, %s52
      %s55 = sphi 0, %s54
      %s69 = sphi 0, %s55
      %s73 = sphi 0, %s73
      %s75 = sphi 0, %s73
      %s76 = sphi 0, %s75
      %s90 = sphi 0, %s76
      %s94 = sphi 0, %s94
      %s96 = sphi 0, %s94
      %s97 = sphi 0, %s96
      %s111 = sphi 0, %s97
      %s117 = sphi 0, %s119
      %s120 = sphi 0, %s117
      %s121 = sphi 0, %s120
      %s137 = sphi 0, %s121
    $region4: #{tpu_custom_call.1} parent=1 // loop_header_branch
      %21 = sbr.rel (%p19) target = $region8
    $region5: #{tpu_custom_call.1} parent=1 // loop_body
      %s23 = ssub.s32 %s18, 1
      %s24 = ssub.s32 %s18, 2
      %s25 = sadd.s32 %s18, 1
      %s26 = ssub.s32 %s18, %s25
      %p27 = scmp.eq.s32.totalorder %s26, 0
      %s29 = sadd.s32 %s28, 1
      %s30 = scalar_select %p27, %s28, %s29
      %p33 = pneg %p27
      %p34 = scmp.eq.s32.totalorder %s18, 1
      %p35 = por %p33, %p34
      %p36 = scmp.ne.s32.totalorder %s28, %s31
      %p37 = scmp.eq.s32.totalorder %s18, 0
      %p38 = por %p36, %p37
      %p39 = scmp.ne.s32.totalorder %s28, %s31
      %p40 = scmp.eq.s32.totalorder %s23, 1
      %p41 = por %p39, %p40
      %p42 = scmp.ne.s32.totalorder %s31, %s32
      %p43 = scmp.eq.s32.totalorder %s23, 0
      %p44 = por %p42, %p43
      %p45 = scmp.ne.s32.totalorder %s31, %s32
      %p46 = scmp.eq.s32.totalorder %s24, 1
      %p47 = por %p45, %p46
      %p49 = scmp.ne.s32.totalorder %s32, %s48
      %p50 = scmp.eq.s32.totalorder %s24, 0
      %p51 = por %p49, %p50
      %s53 = sadd.s32 %s52, 1
      %p56 = scmp.eq.s32.totalorder %s18, 1
      %p57 = scmp.ne.s32.totalorder %s52, %s54
      %p58 = scmp.eq.s32.totalorder %s18, 0
      %p59 = por %p57, %p58
      %p60 = scmp.ne.s32.totalorder %s52, %s54
      %p61 = scmp.eq.s32.totalorder %s23, 1
      %p62 = por %p60, %p61
      %p63 = scmp.ne.s32.totalorder %s54, %s55
      %p64 = scmp.eq.s32.totalorder %s23, 0
      %p65 = por %p63, %p64
      %p66 = scmp.ne.s32.totalorder %s54, %s55
      %p67 = scmp.eq.s32.totalorder %s24, 1
      %p68 = por %p66, %p67
      %p70 = scmp.ne.s32.totalorder %s55, %s69
      %p71 = scmp.eq.s32.totalorder %s24, 0
      %p72 = por %p70, %p71
      %s74 = sadd.s32 %s73, 1
      %p77 = scmp.eq.s32.totalorder %s18, 1
      %p78 = scmp.ne.s32.totalorder %s73, %s75
      %p79 = scmp.eq.s32.totalorder %s18, 0
      %p80 = por %p78, %p79
      %p81 = scmp.ne.s32.totalorder %s73, %s75
      %p82 = scmp.eq.s32.totalorder %s23, 1
      %p83 = por %p81, %p82
      %p84 = scmp.ne.s32.totalorder %s75, %s76
      %p85 = scmp.eq.s32.totalorder %s23, 0
      %p86 = por %p84, %p85
      %p87 = scmp.ne.s32.totalorder %s75, %s76
      %p88 = scmp.eq.s32.totalorder %s24, 1
      %p89 = por %p87, %p88
      %p91 = scmp.ne.s32.totalorder %s76, %s90
      %p92 = scmp.eq.s32.totalorder %s24, 0
      %p93 = por %p91, %p92
      %s95 = sadd.s32 %s94, 1
      %p98 = scmp.eq.s32.totalorder %s18, 1
      %p99 = scmp.ne.s32.totalorder %s94, %s96
      %p100 = scmp.eq.s32.totalorder %s18, 0
      %p101 = por %p99, %p100
      %p102 = scmp.ne.s32.totalorder %s94, %s96
      %p103 = scmp.eq.s32.totalorder %s23, 1
      %p104 = por %p102, %p103
      %p105 = scmp.ne.s32.totalorder %s96, %s97
      %p106 = scmp.eq.s32.totalorder %s23, 0
      %p107 = por %p105, %p106
      %p108 = scmp.ne.s32.totalorder %s96, %s97
      %p109 = scmp.eq.s32.totalorder %s24, 1
      %p110 = por %p108, %p109
      %p112 = scmp.ne.s32.totalorder %s97, %s111
      %p113 = scmp.eq.s32.totalorder %s24, 0
      %p114 = por %p112, %p113
      %s115 = ssub.s32 %s18, %s25
      %p116 = scmp.eq.s32.totalorder %s115, 0
      %s118 = sadd.s32 %s117, 1
      %s119 = scalar_select %p116, %s117, %s118
      %p122 = pneg %p116
      %p123 = scmp.eq.s32.totalorder %s18, 1
      %p124 = por %p122, %p123
      %p125 = scmp.ne.s32.totalorder %s117, %s120
      %p126 = scmp.eq.s32.totalorder %s18, 0
      %p127 = por %p125, %p126
      %p128 = scmp.ne.s32.totalorder %s117, %s120
      %p129 = scmp.eq.s32.totalorder %s23, 1
      %p130 = por %p128, %p129
      %p131 = scmp.ne.s32.totalorder %s120, %s121
      %p132 = scmp.eq.s32.totalorder %s23, 0
      %p133 = por %p131, %p132
      %p134 = scmp.ne.s32.totalorder %s120, %s121
      %p135 = scmp.eq.s32.totalorder %s24, 1
      %p136 = por %p134, %p135
      %p138 = scmp.ne.s32.totalorder %s121, %s137
      %p139 = scmp.eq.s32.totalorder %s24, 0
      %p140 = por %p138, %p139
      %p141 = scmp.le.s32.totalorder 1, %s18
      %p142 = scmp.lt.s32.totalorder %s18, 3
      %p143 = pnand %p141, %p142
      %p144 = pneg %p143
      // Predicated region
      $region9: #{tpu_custom_call.1} parent=5 // pred_check
        _
      $region10: #{tpu_custom_call.1} parent=5 // pred_check_branch
        %146 = sbr.rel (%p143) target = $region12
      $region11: #{tpu_custom_call.1} parent=5 // pred_region
        %s147 = ssub.s32 %s18, 1
        // Predicated region
        $region13: #{tpu_custom_call.1} parent=11 // pred_check
          %p148 = pneg %p65
        $region14: #{tpu_custom_call.1} parent=11 // pred_check_branch
          %150 = sbr.rel (%p148) target = $region16
        $region15: #{tpu_custom_call.1} parent=11 // pred_region
          %s152 = ssub.s32 27648, 27648
          %153 = vsyncadd [#allocation8], %s152
          %s154 = sshll.u32 [#allocation7], 4
          %s155 = int_to_ptr.vmem [resolvable:$true] %s154
          %160 = dma.hbm_to_vmem [thread:$0]  %s1, 27648, %s155, [#allocation8], 576, 576, 36
        $region16: #{tpu_custom_call.1} parent=11 // pred_fallthru
          _
        // Predicated region
        $region17: #{tpu_custom_call.1} parent=11 // pred_check
          %p161 = pneg %p86
        $region18: #{tpu_custom_call.1} parent=11 // pred_check_branch
          %163 = sbr.rel (%p161) target = $region20
        $region19: #{tpu_custom_call.1} parent=11 // pred_region
          %s165 = ssub.s32 9216, 9216
          %166 = vsyncadd [#allocation8], %s165
          %s167 = sshll.u32 [#allocation9], 4
          %s168 = int_to_ptr.vmem [resolvable:$true] %s167
          %173 = dma.hbm_to_vmem [thread:$0]  %s2, 9216, %s168, [#allocation8], 192, 192, 12
        $region20: #{tpu_custom_call.1} parent=11 // pred_fallthru
          _
        // Predicated region
        $region21: #{tpu_custom_call.1} parent=11 // pred_check
          %p174 = pneg %p107
        $region22: #{tpu_custom_call.1} parent=11 // pred_check_branch
          %176 = sbr.rel (%p174) target = $region24
        $region23: #{tpu_custom_call.1} parent=11 // pred_region
          %s178 = ssub.s32 256, 256
          %179 = vsyncadd [#allocation11], %s178
          %s180 = sshll.u32 [#allocation10], 4
          %s181 = int_to_ptr.vmem [resolvable:$true] %s180
          %186 = dma.hbm_to_vmem [thread:$0]  %s3, 256, %s181, [#allocation11], 128, 128, 8
        $region24: #{tpu_custom_call.1} parent=11 // pred_fallthru
          _
      $region12: #{tpu_custom_call.1} parent=5 // pred_fallthru
        _
      %p187 = scmp.lt.s32.totalorder %s18, 2
      // Predicated region
      $region25: #{tpu_custom_call.1} parent=5 // pred_check
        %p188 = pneg %p187
      $region26: #{tpu_custom_call.1} parent=5 // pred_check_branch
        %190 = sbr.rel (%p188) target = $region28
      $region27: #{tpu_custom_call.1} parent=5 // pred_region
        // Predicated region
        $region29: #{tpu_custom_call.1} parent=27 // pred_check
          %p191 = pneg %p38
        $region30: #{tpu_custom_call.1} parent=27 // pred_check_branch
          %193 = sbr.rel (%p191) target = $region32
        $region31: #{tpu_custom_call.1} parent=27 // pred_region
          %s194 = sand.u32 %s28, 1
          %s195 = scalar_lea.sflag [#allocation5], %s194
          %s196 = sand.u32 %s28, 1
          %s197 = smul.addr %s196, 48
          %s198 = scalar_lea.vmem [#allocation4], %s197
          %s200 = ssub.s32 768, 768
          %201 = vsyncadd %s195, %s200
          %s202 = smul.addr %s18, 6
          %s203 = smul.addr %s202, 128
          %s204 = scalar_lea.hbm %s0, %s203
          %s205 = sshll.u32 %s198, 4
          %s206 = int_to_ptr.vmem [resolvable:$true] %s205
          %211 = dma.hbm_to_vmem [thread:$0]  %s204, 768, %s206, %s195, 384, 384, 24
        $region32: #{tpu_custom_call.1} parent=27 // pred_fallthru
          _
      $region28: #{tpu_custom_call.1} parent=5 // pred_fallthru
        _
      %p212 = scmp.le.s32.totalorder 1, %s18
      %p213 = scmp.lt.s32.totalorder %s18, 3
      %p214 = pnand %p212, %p213
      %p215 = pneg %p214
      // Predicated region
      $region33: #{tpu_custom_call.1} parent=5 // pred_check
        _
      $region34: #{tpu_custom_call.1} parent=5 // pred_check_branch
        %217 = sbr.rel (%p214) target = $region36
      $region35: #{tpu_custom_call.1} parent=5 // pred_region
        %s218 = ssub.s32 %s18, 1
        %s219 = sand.u32 %s31, 1
        %s220 = scalar_lea.sflag [#allocation5], %s219
        %s221 = sand.u32 %s31, 1
        %s222 = smul.addr %s221, 48
        %s223 = scalar_lea.vmem [#allocation4], %s222
        // Predicated region
        $region37: #{tpu_custom_call.1} parent=35 // pred_check
          %p224 = pneg %p44
        $region38: #{tpu_custom_call.1} parent=35 // pred_check_branch
          %226 = sbr.rel (%p224) target = $region40
        $region39: #{tpu_custom_call.1} parent=35 // pred_region
          %227 = dma.done %s220, 768
        $region40: #{tpu_custom_call.1} parent=35 // pred_fallthru
          _
        // Predicated region
        $region41: #{tpu_custom_call.1} parent=35 // pred_check
          %p228 = pneg %p65
        $region42: #{tpu_custom_call.1} parent=35 // pred_check_branch
          %230 = sbr.rel (%p228) target = $region44
        $region43: #{tpu_custom_call.1} parent=35 // pred_region
          %231 = dma.done [#allocation8], 27648
        $region44: #{tpu_custom_call.1} parent=35 // pred_fallthru
          _
        // Predicated region
        $region45: #{tpu_custom_call.1} parent=35 // pred_check
          %p232 = pneg %p86
        $region46: #{tpu_custom_call.1} parent=35 // pred_check_branch
          %234 = sbr.rel (%p232) target = $region48
        $region47: #{tpu_custom_call.1} parent=35 // pred_region
          %235 = dma.done [#allocation8], 9216
        $region48: #{tpu_custom_call.1} parent=35 // pred_fallthru
          _
        // Predicated region
        $region49: #{tpu_custom_call.1} parent=35 // pred_check
          %p236 = pneg %p107
        $region50: #{tpu_custom_call.1} parent=35 // pred_check_branch
          %238 = sbr.rel (%p236) target = $region52
        $region51: #{tpu_custom_call.1} parent=35 // pred_region
          %239 = dma.done [#allocation11], 256
        $region52: #{tpu_custom_call.1} parent=35 // pred_fallthru
          _
        %s240 = sand.u32 %s31, 1
        %s241 = scalar_lea.sflag [#allocation5], %s240
        %s242 = sand.u32 %s31, 1
        %s243 = smul.addr %s242, 48
        %s244 = scalar_lea.vmem [#allocation4], %s243
        %p245 = pneg %p44
        %p246 = pneg %p41
        %p247 = pneg %p65
        %p248 = pneg %p62
        %p249 = pneg %p86
        %p250 = pneg %p83
        %p251 = pneg %p107
        %p252 = pneg %p104
        %p253 = pneg %p133
        %p254 = pneg %p130
        %s255 = sand.u32 %s120, 1
        %s256 = scalar_lea.sflag [#allocation6], %s255
        %s257 = sand.u32 %s120, 1
        %s258 = smul.addr %s257, 48
        %s259 = scalar_lea.vmem [#allocation12], %s258
        %v261 = vld [vmem:[%s223] sm:$0xff]
        %v262 = vld [vmem:[%s223 + $0x8] sm:$0xff]
        %v263 = vld [vmem:[%s223 + $0x10] sm:$0xff]
        %v264 = vld [vmem:[%s223 + $0x18] sm:$0xff]
        %v265 = vld [vmem:[%s223 + $0x20] sm:$0xff]
        %v266 = vld [vmem:[%s223 + $0x28] sm:$0xff]
        %v267 = vadd.f32 %v261, %v262
        %v268 = vadd.f32 %v267, %v263
        %269 = vadd.xlane.f32.xlu0 %v268
        %v270 = vpop.xlane.xlu0 %269
        %v271 = vadd.f32 %v264, %v265
        %v272 = vadd.f32 %v271, %v266
        %273 = vadd.xlane.f32.xlu0 %v272
        %v274 = vpop.xlane.xlu0 %273
        %v275 = vrcp.pop 384.0
        %v276 = vmul.f32 %v270, %v275
        %v277 = vmul.f32 %v274, %v275
        %v278 = vsub.f32 %v261, %v276
        %v279 = vsub.f32 %v262, %v276
        %v280 = vsub.f32 %v263, %v276
        %v281 = vsub.f32 %v264, %v277
        %v282 = vsub.f32 %v265, %v277
        %v283 = vsub.f32 %v266, %v277
        %v284 = vmul.f32 %v278, %v278
        %v285 = vmul.f32 %v279, %v279
        %v286 = vmul.f32 %v280, %v280
        %v287 = vmul.f32 %v281, %v281
        %v288 = vmul.f32 %v282, %v282
        %v289 = vmul.f32 %v283, %v283
        %v290 = vadd.f32 %v284, %v285
        %v291 = vadd.f32 %v290, %v286
        %292 = vadd.xlane.f32.xlu0 %v291
        %v293 = vpop.xlane.xlu0 %292
        %v294 = vadd.f32 %v287, %v288
        %v295 = vadd.f32 %v294, %v289
        %296 = vadd.xlane.f32.xlu0 %v295
        %v297 = vpop.xlane.xlu0 %296
        %v298 = vmul.f32 %v293, %v275
        %v299 = vmul.f32 %v297, %v275
        %v300 = vadd.f32 %v298, 1e-05
        %v301 = vadd.f32 %v299, 1e-05
        %v302 = vrsqrt.pop %v300
        %v303 = vrsqrt.pop %v301
        %v304 = vmul.f32 %v278, %v302
        %v305 = vmul.f32 %v279, %v302
        %v306 = vmul.f32 %v280, %v302
        %v307 = vmul.f32 %v281, %v303
        %v308 = vmul.f32 %v282, %v303
        %v309 = vmul.f32 %v283, %v303
        %v310 = vpack.c.bf16 %v307, %v304
        %v311 = vpack.c.bf16 %v308, %v305
        %v312 = vpack.c.bf16 %v309, %v306
        %v313 = vld [vmem:[#allocation7] sm:$0xff]
        %v314 = vld [vmem:[#allocation7 + $0x8] sm:$0xff]
        %v315 = vld [vmem:[#allocation7 + $0x10] sm:$0xff]
        %v316 = vld [vmem:[#allocation7 + $0x18] sm:$0xff]
        %v317 = vld [vmem:[#allocation7 + $0x20] sm:$0xf]
        %v318 = vld [vmem:[#allocation7 + $0x24] sm:$0xff]
        %v319 = vld [vmem:[#allocation7 + $0x2c] sm:$0xff]
        %v320 = vld [vmem:[#allocation7 + $0x34] sm:$0xff]
        %v321 = vld [vmem:[#allocation7 + $0x3c] sm:$0xff]
        %v322 = vld [vmem:[#allocation7 + $0x44] sm:$0xf]
        %v323 = vld [vmem:[#allocation7 + $0x48] sm:$0xff]
        %v324 = vld [vmem:[#allocation7 + $0x50] sm:$0xff]
        %v325 = vld [vmem:[#allocation7 + $0x58] sm:$0xff]
        %v326 = vld [vmem:[#allocation7 + $0x60] sm:$0xff]
        %v327 = vld [vmem:[#allocation7 + $0x68] sm:$0xf]
        %v328 = vld [vmem:[#allocation7 + $0x6c] sm:$0xff]
        %v329 = vld [vmem:[#allocation7 + $0x74] sm:$0xff]
        %v330 = vld [vmem:[#allocation7 + $0x7c] sm:$0xff]
        %v331 = vld [vmem:[#allocation7 + $0x84] sm:$0xff]
        %v332 = vld [vmem:[#allocation7 + $0x8c] sm:$0xf]
        %v333 = vld [vmem:[#allocation7 + $0x90] sm:$0xff]
        %v334 = vld [vmem:[#allocation7 + $0x98] sm:$0xff]
        %v335 = vld [vmem:[#allocation7 + $0xa0] sm:$0xff]
        %v336 = vld [vmem:[#allocation7 + $0xa8] sm:$0xff]
        %v337 = vld [vmem:[#allocation7 + $0xb0] sm:$0xf]
        %v338 = vld [vmem:[#allocation7 + $0xb4] sm:$0xff]
        %v339 = vld [vmem:[#allocation7 + $0xbc] sm:$0xff]
        %v340 = vld [vmem:[#allocation7 + $0xc4] sm:$0xff]
        %v341 = vld [vmem:[#allocation7 + $0xcc] sm:$0xff]
        %v342 = vld [vmem:[#allocation7 + $0xd4] sm:$0xf]
        %v343 = vld [vmem:[#allocation7 + $0xd8] sm:$0xff]
        %v344 = vld [vmem:[#allocation7 + $0xe0] sm:$0xff]
        %v345 = vld [vmem:[#allocation7 + $0xe8] sm:$0xff]
        %v346 = vld [vmem:[#allocation7 + $0xf0] sm:$0xff]
        %v347 = vld [vmem:[#allocation7 + $0xf8] sm:$0xf]
        %v348 = vld [vmem:[#allocation7 + $0xfc] sm:$0xff]
        %v349 = vld [vmem:[#allocation7 + $0x104] sm:$0xff]
        %v350 = vld [vmem:[#allocation7 + $0x10c] sm:$0xff]
        %v351 = vld [vmem:[#allocation7 + $0x114] sm:$0xff]
        %v352 = vld [vmem:[#allocation7 + $0x11c] sm:$0xf]
        %v353 = vld [vmem:[#allocation7 + $0x120] sm:$0xff]
        %v354 = vld [vmem:[#allocation7 + $0x128] sm:$0xff]
        %v355 = vld [vmem:[#allocation7 + $0x130] sm:$0xff]
        %v356 = vld [vmem:[#allocation7 + $0x138] sm:$0xff]
        %v357 = vld [vmem:[#allocation7 + $0x140] sm:$0xf]
        %v358 = vld [vmem:[#allocation7 + $0x144] sm:$0xff]
        %v359 = vld [vmem:[#allocation7 + $0x14c] sm:$0xff]
        %v360 = vld [vmem:[#allocation7 + $0x154] sm:$0xff]
        %v361 = vld [vmem:[#allocation7 + $0x15c] sm:$0xff]
        %v362 = vld [vmem:[#allocation7 + $0x164] sm:$0xf]
        %v363 = vld [vmem:[#allocation7 + $0x168] sm:$0xff]
        %v364 = vld [vmem:[#allocation7 + $0x170] sm:$0xff]
        %v365 = vld [vmem:[#allocation7 + $0x178] sm:$0xff]
        %v366 = vld [vmem:[#allocation7 + $0x180] sm:$0xff]
        %v367 = vld [vmem:[#allocation7 + $0x188] sm:$0xf]
        %v368 = vld [vmem:[#allocation7 + $0x18c] sm:$0xff]
        %v369 = vld [vmem:[#allocation7 + $0x194] sm:$0xff]
        %v370 = vld [vmem:[#allocation7 + $0x19c] sm:$0xff]
        %v371 = vld [vmem:[#allocation7 + $0x1a4] sm:$0xff]
        %v372 = vld [vmem:[#allocation7 + $0x1ac] sm:$0xf]
        %v373 = vld [vmem:[#allocation7 + $0x1b0] sm:$0xff]
        %v374 = vld [vmem:[#allocation7 + $0x1b8] sm:$0xff]
        %v375 = vld [vmem:[#allocation7 + $0x1c0] sm:$0xff]
        %v376 = vld [vmem:[#allocation7 + $0x1c8] sm:$0xff]
        %v377 = vld [vmem:[#allocation7 + $0x1d0] sm:$0xf]
        %v378 = vld [vmem:[#allocation7 + $0x1d4] sm:$0xff]
        %v379 = vld [vmem:[#allocation7 + $0x1dc] sm:$0xff]
        %v380 = vld [vmem:[#allocation7 + $0x1e4] sm:$0xff]
        %v381 = vld [vmem:[#allocation7 + $0x1ec] sm:$0xff]
        %v382 = vld [vmem:[#allocation7 + $0x1f4] sm:$0xf]
        %v383 = vld [vmem:[#allocation7 + $0x1f8] sm:$0xff]
        %v384 = vld [vmem:[#allocation7 + $0x200] sm:$0xff]
        %v385 = vld [vmem:[#allocation7 + $0x208] sm:$0xff]
        %v386 = vld [vmem:[#allocation7 + $0x210] sm:$0xff]
        %v387 = vld [vmem:[#allocation7 + $0x218] sm:$0xf]
        %v388 = vld [vmem:[#allocation7 + $0x21c] sm:$0xff]
        %v389 = vld [vmem:[#allocation7 + $0x224] sm:$0xff]
        %v390 = vld [vmem:[#allocation7 + $0x22c] sm:$0xff]
        %v391 = vld [vmem:[#allocation7 + $0x234] sm:$0xff]
        %v392 = vld [vmem:[#allocation7 + $0x23c] sm:$0xf]
        %v393 = vld [vmem:[#allocation7 + $0x240] sm:$0xff]
        %v394 = vld [vmem:[#allocation7 + $0x248] sm:$0xff]
        %v395 = vld [vmem:[#allocation7 + $0x250] sm:$0xff]
        %v396 = vld [vmem:[#allocation7 + $0x258] sm:$0xff]
        %v397 = vld [vmem:[#allocation7 + $0x260] sm:$0xf]
        %v398 = vld [vmem:[#allocation7 + $0x264] sm:$0xff]
        %v399 = vld [vmem:[#allocation7 + $0x26c] sm:$0xff]
        %v400 = vld [vmem:[#allocation7 + $0x274] sm:$0xff]
        %v401 = vld [vmem:[#allocation7 + $0x27c] sm:$0xff]
        %v402 = vld [vmem:[#allocation7 + $0x284] sm:$0xf]
        %v403 = vld [vmem:[#allocation7 + $0x288] sm:$0xff]
        %v404 = vld [vmem:[#allocation7 + $0x290] sm:$0xff]
        %v405 = vld [vmem:[#allocation7 + $0x298] sm:$0xff]
        %v406 = vld [vmem:[#allocation7 + $0x2a0] sm:$0xff]
        %v407 = vld [vmem:[#allocation7 + $0x2a8] sm:$0xf]
        %v408 = vld [vmem:[#allocation7 + $0x2ac] sm:$0xff]
        %v409 = vld [vmem:[#allocation7 + $0x2b4] sm:$0xff]
        %v410 = vld [vmem:[#allocation7 + $0x2bc] sm:$0xff]
        %v411 = vld [vmem:[#allocation7 + $0x2c4] sm:$0xff]
        %v412 = vld [vmem:[#allocation7 + $0x2cc] sm:$0xf]
        %v413 = vld [vmem:[#allocation7 + $0x2d0] sm:$0xff]
        %v414 = vld [vmem:[#allocation7 + $0x2d8] sm:$0xff]
        %v415 = vld [vmem:[#allocation7 + $0x2e0] sm:$0xff]
        %v416 = vld [vmem:[#allocation7 + $0x2e8] sm:$0xff]
        %v417 = vld [vmem:[#allocation7 + $0x2f0] sm:$0xf]
        %v418 = vld [vmem:[#allocation7 + $0x2f4] sm:$0xff]
        %v419 = vld [vmem:[#allocation7 + $0x2fc] sm:$0xff]
        %v420 = vld [vmem:[#allocation7 + $0x304] sm:$0xff]
        %v421 = vld [vmem:[#allocation7 + $0x30c] sm:$0xff]
        %v422 = vld [vmem:[#allocation7 + $0x314] sm:$0xf]
        %v423 = vld [vmem:[#allocation7 + $0x318] sm:$0xff]
        %v424 = vld [vmem:[#allocation7 + $0x320] sm:$0xff]
        %v425 = vld [vmem:[#allocation7 + $0x328] sm:$0xff]
        %v426 = vld [vmem:[#allocation7 + $0x330] sm:$0xff]
        %v427 = vld [vmem:[#allocation7 + $0x338] sm:$0xf]
        %v428 = vld [vmem:[#allocation7 + $0x33c] sm:$0xff]
        %v429 = vld [vmem:[#allocation7 + $0x344] sm:$0xff]
        %v430 = vld [vmem:[#allocation7 + $0x34c] sm:$0xff]
        %v431 = vld [vmem:[#allocation7 + $0x354] sm:$0xff]
        %v432 = vld [vmem:[#allocation7 + $0x35c] sm:$0xf]
        %v433 = vld [vmem:[#allocation7 + $0x360] sm:$0xff]
        %v434 = vld [vmem:[#allocation7 + $0x368] sm:$0xff]
        %v435 = vld [vmem:[#allocation7 + $0x370] sm:$0xff]
        %v436 = vld [vmem:[#allocation7 + $0x378] sm:$0xff]
        %v437 = vld [vmem:[#allocation7 + $0x380] sm:$0xf]
        %v438 = vld [vmem:[#allocation7 + $0x384] sm:$0xff]
        %v439 = vld [vmem:[#allocation7 + $0x38c] sm:$0xff]
        %v440 = vld [vmem:[#allocation7 + $0x394] sm:$0xff]
        %v441 = vld [vmem:[#allocation7 + $0x39c] sm:$0xff]
        %v442 = vld [vmem:[#allocation7 + $0x3a4] sm:$0xf]
        %v443 = vld [vmem:[#allocation7 + $0x3a8] sm:$0xff]
        %v444 = vld [vmem:[#allocation7 + $0x3b0] sm:$0xff]
        %v445 = vld [vmem:[#allocation7 + $0x3b8] sm:$0xff]
        %v446 = vld [vmem:[#allocation7 + $0x3c0] sm:$0xff]
        %v447 = vld [vmem:[#allocation7 + $0x3c8] sm:$0xf]
        %v448 = vld [vmem:[#allocation7 + $0x3cc] sm:$0xff]
        %v449 = vld [vmem:[#allocation7 + $0x3d4] sm:$0xff]
        %v450 = vld [vmem:[#allocation7 + $0x3dc] sm:$0xff]
        %v451 = vld [vmem:[#allocation7 + $0x3e4] sm:$0xff]
        %v452 = vld [vmem:[#allocation7 + $0x3ec] sm:$0xf]
        %v453 = vld [vmem:[#allocation7 + $0x3f0] sm:$0xff]
        %v454 = vld [vmem:[#allocation7 + $0x3f8] sm:$0xff]
        %v455 = vld [vmem:[#allocation7 + $0x400] sm:$0xff]
        %v456 = vld [vmem:[#allocation7 + $0x408] sm:$0xff]
        %v457 = vld [vmem:[#allocation7 + $0x410] sm:$0xf]
        %v458 = vld [vmem:[#allocation7 + $0x414] sm:$0xff]
        %v459 = vld [vmem:[#allocation7 + $0x41c] sm:$0xff]
        %v460 = vld [vmem:[#allocation7 + $0x424] sm:$0xff]
        %v461 = vld [vmem:[#allocation7 + $0x42c] sm:$0xff]
        %v462 = vld [vmem:[#allocation7 + $0x434] sm:$0xf]
        %v463 = vld [vmem:[#allocation7 + $0x438] sm:$0xff]
        %v464 = vld [vmem:[#allocation7 + $0x440] sm:$0xff]
        %v465 = vld [vmem:[#allocation7 + $0x448] sm:$0xff]
        %v466 = vld [vmem:[#allocation7 + $0x450] sm:$0xff]
        %v467 = vld [vmem:[#allocation7 + $0x458] sm:$0xf]
        %v468 = vld [vmem:[#allocation7 + $0x45c] sm:$0xff]
        %v469 = vld [vmem:[#allocation7 + $0x464] sm:$0xff]
        %v470 = vld [vmem:[#allocation7 + $0x46c] sm:$0xff]
        %v471 = vld [vmem:[#allocation7 + $0x474] sm:$0xff]
        %v472 = vld [vmem:[#allocation7 + $0x47c] sm:$0xf]
        %v473 = vld [vmem:[#allocation7 + $0x480] sm:$0xff]
        %v474 = vld [vmem:[#allocation7 + $0x488] sm:$0xff]
        %v475 = vld [vmem:[#allocation7 + $0x490] sm:$0xff]
        %v476 = vld [vmem:[#allocation7 + $0x498] sm:$0xff]
        %v477 = vld [vmem:[#allocation7 + $0x4a0] sm:$0xf]
        %v478 = vld [vmem:[#allocation7 + $0x4a4] sm:$0xff]
        %v479 = vld [vmem:[#allocation7 + $0x4ac] sm:$0xff]
        %v480 = vld [vmem:[#allocation7 + $0x4b4] sm:$0xff]
        %v481 = vld [vmem:[#allocation7 + $0x4bc] sm:$0xff]
        %v482 = vld [vmem:[#allocation7 + $0x4c4] sm:$0xf]
        %v483 = vld [vmem:[#allocation7 + $0x4c8] sm:$0xff]
        %v484 = vld [vmem:[#allocation7 + $0x4d0] sm:$0xff]
        %v485 = vld [vmem:[#allocation7 + $0x4d8] sm:$0xff]
        %v486 = vld [vmem:[#allocation7 + $0x4e0] sm:$0xff]
        %v487 = vld [vmem:[#allocation7 + $0x4e8] sm:$0xf]
        %v488 = vld [vmem:[#allocation7 + $0x4ec] sm:$0xff]
        %v489 = vld [vmem:[#allocation7 + $0x4f4] sm:$0xff]
        %v490 = vld [vmem:[#allocation7 + $0x4fc] sm:$0xff]
        %v491 = vld [vmem:[#allocation7 + $0x504] sm:$0xff]
        %v492 = vld [vmem:[#allocation7 + $0x50c] sm:$0xf]
        %v493 = vld [vmem:[#allocation7 + $0x510] sm:$0xff]
        %v494 = vld [vmem:[#allocation7 + $0x518] sm:$0xff]
        %v495 = vld [vmem:[#allocation7 + $0x520] sm:$0xff]
        %v496 = vld [vmem:[#allocation7 + $0x528] sm:$0xff]
        %v497 = vld [vmem:[#allocation7 + $0x530] sm:$0xf]
        %v498 = vld [vmem:[#allocation7 + $0x534] sm:$0xff]
        %v499 = vld [vmem:[#allocation7 + $0x53c] sm:$0xff]
        %v500 = vld [vmem:[#allocation7 + $0x544] sm:$0xff]
        %v501 = vld [vmem:[#allocation7 + $0x54c] sm:$0xff]
        %v502 = vld [vmem:[#allocation7 + $0x554] sm:$0xf]
        %v503 = vld [vmem:[#allocation7 + $0x558] sm:$0xff]
        %v504 = vld [vmem:[#allocation7 + $0x560] sm:$0xff]
        %v505 = vld [vmem:[#allocation7 + $0x568] sm:$0xff]
        %v506 = vld [vmem:[#allocation7 + $0x570] sm:$0xff]
        %v507 = vld [vmem:[#allocation7 + $0x578] sm:$0xf]
        %v508 = vld [vmem:[#allocation7 + $0x57c] sm:$0xff]
        %v509 = vld [vmem:[#allocation7 + $0x584] sm:$0xff]
        %v510 = vld [vmem:[#allocation7 + $0x58c] sm:$0xff]
        %v511 = vld [vmem:[#allocation7 + $0x594] sm:$0xff]
        %v512 = vld [vmem:[#allocation7 + $0x59c] sm:$0xf]
        %v513 = vld [vmem:[#allocation7 + $0x5a0] sm:$0xff]
        %v514 = vld [vmem:[#allocation7 + $0x5a8] sm:$0xff]
        %v515 = vld [vmem:[#allocation7 + $0x5b0] sm:$0xff]
        %v516 = vld [vmem:[#allocation7 + $0x5b8] sm:$0xff]
        %v517 = vld [vmem:[#allocation7 + $0x5c0] sm:$0xf]
        %v518 = vld [vmem:[#allocation7 + $0x5c4] sm:$0xff]
        %v519 = vld [vmem:[#allocation7 + $0x5cc] sm:$0xff]
        %v520 = vld [vmem:[#allocation7 + $0x5d4] sm:$0xff]
        %v521 = vld [vmem:[#allocation7 + $0x5dc] sm:$0xff]
        %v522 = vld [vmem:[#allocation7 + $0x5e4] sm:$0xf]
        %v523 = vld [vmem:[#allocation7 + $0x5e8] sm:$0xff]
        %v524 = vld [vmem:[#allocation7 + $0x5f0] sm:$0xff]
        %v525 = vld [vmem:[#allocation7 + $0x5f8] sm:$0xff]
        %v526 = vld [vmem:[#allocation7 + $0x600] sm:$0xff]
        %v527 = vld [vmem:[#allocation7 + $0x608] sm:$0xf]
        %v528 = vld [vmem:[#allocation7 + $0x60c] sm:$0xff]
        %v529 = vld [vmem:[#allocation7 + $0x614] sm:$0xff]
        %v530 = vld [vmem:[#allocation7 + $0x61c] sm:$0xff]
        %v531 = vld [vmem:[#allocation7 + $0x624] sm:$0xff]
        %v532 = vld [vmem:[#allocation7 + $0x62c] sm:$0xf]
        %v533 = vld [vmem:[#allocation7 + $0x630] sm:$0xff]
        %v534 = vld [vmem:[#allocation7 + $0x638] sm:$0xff]
        %v535 = vld [vmem:[#allocation7 + $0x640] sm:$0xff]
        %v536 = vld [vmem:[#allocation7 + $0x648] sm:$0xff]
        %v537 = vld [vmem:[#allocation7 + $0x650] sm:$0xf]
        %v538 = vld [vmem:[#allocation7 + $0x654] sm:$0xff]
        %v539 = vld [vmem:[#allocation7 + $0x65c] sm:$0xff]
        %v540 = vld [vmem:[#allocation7 + $0x664] sm:$0xff]
        %v541 = vld [vmem:[#allocation7 + $0x66c] sm:$0xff]
        %v542 = vld [vmem:[#allocation7 + $0x674] sm:$0xf]
        %v543 = vld [vmem:[#allocation7 + $0x678] sm:$0xff]
        %v544 = vld [vmem:[#allocation7 + $0x680] sm:$0xff]
        %v545 = vld [vmem:[#allocation7 + $0x688] sm:$0xff]
        %v546 = vld [vmem:[#allocation7 + $0x690] sm:$0xff]
        %v547 = vld [vmem:[#allocation7 + $0x698] sm:$0xf]
        %v548 = vld [vmem:[#allocation7 + $0x69c] sm:$0xff]
        %v549 = vld [vmem:[#allocation7 + $0x6a4] sm:$0xff]
        %v550 = vld [vmem:[#allocation7 + $0x6ac] sm:$0xff]
        %v551 = vld [vmem:[#allocation7 + $0x6b4] sm:$0xff]
        %v552 = vld [vmem:[#allocation7 + $0x6bc] sm:$0xf]
        %v793 = vunpack.c.l.b16 %v313
        %v794 = vunpack.c.h.b16 %v313
        %v795 = vunpack.c.l.b16 %v314
        %v796 = vunpack.c.h.b16 %v314
        %v797 = vunpack.c.l.b16 %v315
        %v798 = vunpack.c.h.b16 %v315
        %v799 = vunpack.c.l.b16 %v316
        %v800 = vunpack.c.h.b16 %v316
        %v801 = vunpack.c.l.b16 %v317
        %v802 = vunpack.c.l.b16 %v318
        %v803 = vunpack.c.h.b16 %v318
        %v804 = vunpack.c.l.b16 %v319
        %v805 = vunpack.c.h.b16 %v319
        %v806 = vunpack.c.l.b16 %v320
        %v807 = vunpack.c.h.b16 %v320
        %v808 = vunpack.c.l.b16 %v321
        %v809 = vunpack.c.h.b16 %v321
        %v810 = vunpack.c.l.b16 %v322
        %v811 = vunpack.c.l.b16 %v323
        %v812 = vunpack.c.h.b16 %v323
        %v813 = vunpack.c.l.b16 %v324
        %v814 = vunpack.c.h.b16 %v324
        %v815 = vunpack.c.l.b16 %v325
        %v816 = vunpack.c.h.b16 %v325
        %v817 = vunpack.c.l.b16 %v326
        %v818 = vunpack.c.h.b16 %v326
        %v819 = vunpack.c.l.b16 %v327
        %v820 = vunpack.c.l.b16 %v328
        %v821 = vunpack.c.h.b16 %v328
        %v822 = vunpack.c.l.b16 %v329
        %v823 = vunpack.c.h.b16 %v329
        %v824 = vunpack.c.l.b16 %v330
        %v825 = vunpack.c.h.b16 %v330
        %v826 = vunpack.c.l.b16 %v331
        %v827 = vunpack.c.h.b16 %v331
        %v828 = vunpack.c.l.b16 %v332
        %v829 = vunpack.c.l.b16 %v333
        %v830 = vunpack.c.h.b16 %v333
        %v831 = vunpack.c.l.b16 %v334
        %v832 = vunpack.c.h.b16 %v334
        %v833 = vunpack.c.l.b16 %v335
        %v834 = vunpack.c.h.b16 %v335
        %v835 = vunpack.c.l.b16 %v336
        %v836 = vunpack.c.h.b16 %v336
        %v837 = vunpack.c.l.b16 %v337
        %v838 = vunpack.c.l.b16 %v338
        %v839 = vunpack.c.h.b16 %v338
        %v840 = vunpack.c.l.b16 %v339
        %v841 = vunpack.c.h.b16 %v339
        %v842 = vunpack.c.l.b16 %v340
        %v843 = vunpack.c.h.b16 %v340
        %v844 = vunpack.c.l.b16 %v341
        %v845 = vunpack.c.h.b16 %v341
        %v846 = vunpack.c.l.b16 %v342
        %v847 = vunpack.c.l.b16 %v343
        %v848 = vunpack.c.h.b16 %v343
        %v849 = vunpack.c.l.b16 %v344
        %v850 = vunpack.c.h.b16 %v344
        %v851 = vunpack.c.l.b16 %v345
        %v852 = vunpack.c.h.b16 %v345
        %v853 = vunpack.c.l.b16 %v346
        %v854 = vunpack.c.h.b16 %v346
        %v855 = vunpack.c.l.b16 %v347
        %v856 = vunpack.c.l.b16 %v348
        %v857 = vunpack.c.h.b16 %v348
        %v858 = vunpack.c.l.b16 %v349
        %v859 = vunpack.c.h.b16 %v349
        %v860 = vunpack.c.l.b16 %v350
        %v861 = vunpack.c.h.b16 %v350
        %v862 = vunpack.c.l.b16 %v351
        %v863 = vunpack.c.h.b16 %v351
        %v864 = vunpack.c.l.b16 %v352
        %v865 = vunpack.c.l.b16 %v353
        %v866 = vunpack.c.h.b16 %v353
        %v867 = vunpack.c.l.b16 %v354
        %v868 = vunpack.c.h.b16 %v354
        %v869 = vunpack.c.l.b16 %v355
        %v870 = vunpack.c.h.b16 %v355
        %v871 = vunpack.c.l.b16 %v356
        %v872 = vunpack.c.h.b16 %v356
        %v873 = vunpack.c.l.b16 %v357
        %v874 = vunpack.c.l.b16 %v358
        %v875 = vunpack.c.h.b16 %v358
        %v876 = vunpack.c.l.b16 %v359
        %v877 = vunpack.c.h.b16 %v359
        %v878 = vunpack.c.l.b16 %v360
        %v879 = vunpack.c.h.b16 %v360
        %v880 = vunpack.c.l.b16 %v361
        %v881 = vunpack.c.h.b16 %v361
        %v882 = vunpack.c.l.b16 %v362
        %v883 = vunpack.c.l.b16 %v363
        %v884 = vunpack.c.h.b16 %v363
        %v885 = vunpack.c.l.b16 %v364
        %v886 = vunpack.c.h.b16 %v364
        %v887 = vunpack.c.l.b16 %v365
        %v888 = vunpack.c.h.b16 %v365
        %v889 = vunpack.c.l.b16 %v366
        %v890 = vunpack.c.h.b16 %v366
        %v891 = vunpack.c.l.b16 %v367
        %v892 = vunpack.c.l.b16 %v368
        %v893 = vunpack.c.h.b16 %v368
        %v894 = vunpack.c.l.b16 %v369
        %v895 = vunpack.c.h.b16 %v369
        %v896 = vunpack.c.l.b16 %v370
        %v897 = vunpack.c.h.b16 %v370
        %v898 = vunpack.c.l.b16 %v371
        %v899 = vunpack.c.h.b16 %v371
        %v900 = vunpack.c.l.b16 %v372
        %v901 = vunpack.c.l.b16 %v373
        %v902 = vunpack.c.h.b16 %v373
        %v903 = vunpack.c.l.b16 %v374
        %v904 = vunpack.c.h.b16 %v374
        %v905 = vunpack.c.l.b16 %v375
        %v906 = vunpack.c.h.b16 %v375
        %v907 = vunpack.c.l.b16 %v376
        %v908 = vunpack.c.h.b16 %v376
        %v909 = vunpack.c.l.b16 %v377
        %v910 = vunpack.c.l.b16 %v378
        %v911 = vunpack.c.h.b16 %v378
        %v912 = vunpack.c.l.b16 %v379
        %v913 = vunpack.c.h.b16 %v379
        %v914 = vunpack.c.l.b16 %v380
        %v915 = vunpack.c.h.b16 %v380
        %v916 = vunpack.c.l.b16 %v381
        %v917 = vunpack.c.h.b16 %v381
        %v918 = vunpack.c.l.b16 %v382
        %v919 = vunpack.c.l.b16 %v383
        %v920 = vunpack.c.h.b16 %v383
        %v921 = vunpack.c.l.b16 %v384
        %v922 = vunpack.c.h.b16 %v384
        %v923 = vunpack.c.l.b16 %v385
        %v924 = vunpack.c.h.b16 %v385
        %v925 = vunpack.c.l.b16 %v386
        %v926 = vunpack.c.h.b16 %v386
        %v927 = vunpack.c.l.b16 %v387
        %v928 = vunpack.c.l.b16 %v388
        %v929 = vunpack.c.h.b16 %v388
        %v930 = vunpack.c.l.b16 %v389
        %v931 = vunpack.c.h.b16 %v389
        %v932 = vunpack.c.l.b16 %v390
        %v933 = vunpack.c.h.b16 %v390
        %v934 = vunpack.c.l.b16 %v391
        %v935 = vunpack.c.h.b16 %v391
        %v936 = vunpack.c.l.b16 %v392
        %v937 = vunpack.c.l.b16 %v393
        %v938 = vunpack.c.h.b16 %v393
        %v939 = vunpack.c.l.b16 %v394
        %v940 = vunpack.c.h.b16 %v394
        %v941 = vunpack.c.l.b16 %v395
        %v942 = vunpack.c.h.b16 %v395
        %v943 = vunpack.c.l.b16 %v396
        %v944 = vunpack.c.h.b16 %v396
        %v945 = vunpack.c.l.b16 %v397
        %v946 = vunpack.c.l.b16 %v398
        %v947 = vunpack.c.h.b16 %v398
        %v948 = vunpack.c.l.b16 %v399
        %v949 = vunpack.c.h.b16 %v399
        %v950 = vunpack.c.l.b16 %v400
        %v951 = vunpack.c.h.b16 %v400
        %v952 = vunpack.c.l.b16 %v401
        %v953 = vunpack.c.h.b16 %v401
        %v954 = vunpack.c.l.b16 %v402
        %v955 = vunpack.c.l.b16 %v403
        %v956 = vunpack.c.h.b16 %v403
        %v957 = vunpack.c.l.b16 %v404
        %v958 = vunpack.c.h.b16 %v404
        %v959 = vunpack.c.l.b16 %v405
        %v960 = vunpack.c.h.b16 %v405
        %v961 = vunpack.c.l.b16 %v406
        %v962 = vunpack.c.h.b16 %v406
        %v963 = vunpack.c.l.b16 %v407
        %v964 = vunpack.c.l.b16 %v408
        %v965 = vunpack.c.h.b16 %v408
        %v966 = vunpack.c.l.b16 %v409
        %v967 = vunpack.c.h.b16 %v409
        %v968 = vunpack.c.l.b16 %v410
        %v969 = vunpack.c.h.b16 %v410
        %v970 = vunpack.c.l.b16 %v411
        %v971 = vunpack.c.h.b16 %v411
        %v972 = vunpack.c.l.b16 %v412
        %v973 = vunpack.c.l.b16 %v413
        %v974 = vunpack.c.h.b16 %v413
        %v975 = vunpack.c.l.b16 %v414
        %v976 = vunpack.c.h.b16 %v414
        %v977 = vunpack.c.l.b16 %v415
        %v978 = vunpack.c.h.b16 %v415
        %v979 = vunpack.c.l.b16 %v416
        %v980 = vunpack.c.h.b16 %v416
        %v981 = vunpack.c.l.b16 %v417
        %v982 = vunpack.c.l.b16 %v418
        %v983 = vunpack.c.h.b16 %v418
        %v984 = vunpack.c.l.b16 %v419
        %v985 = vunpack.c.h.b16 %v419
        %v986 = vunpack.c.l.b16 %v420
        %v987 = vunpack.c.h.b16 %v420
        %v988 = vunpack.c.l.b16 %v421
        %v989 = vunpack.c.h.b16 %v421
        %v990 = vunpack.c.l.b16 %v422
        %v991 = vunpack.c.l.b16 %v423
        %v992 = vunpack.c.h.b16 %v423
        %v993 = vunpack.c.l.b16 %v424
        %v994 = vunpack.c.h.b16 %v424
        %v995 = vunpack.c.l.b16 %v425
        %v996 = vunpack.c.h.b16 %v425
        %v997 = vunpack.c.l.b16 %v426
        %v998 = vunpack.c.h.b16 %v426
        %v999 = vunpack.c.l.b16 %v427
        %v1000 = vunpack.c.l.b16 %v428
        %v1001 = vunpack.c.h.b16 %v428
        %v1002 = vunpack.c.l.b16 %v429
        %v1003 = vunpack.c.h.b16 %v429
        %v1004 = vunpack.c.l.b16 %v430
        %v1005 = vunpack.c.h.b16 %v430
        %v1006 = vunpack.c.l.b16 %v431
        %v1007 = vunpack.c.h.b16 %v431
        %v1008 = vunpack.c.l.b16 %v432
        %v1009 = vunpack.c.l.b16 %v433
        %v1010 = vunpack.c.h.b16 %v433
        %v1011 = vunpack.c.l.b16 %v434
        %v1012 = vunpack.c.h.b16 %v434
        %v1013 = vunpack.c.l.b16 %v435
        %v1014 = vunpack.c.h.b16 %v435
        %v1015 = vunpack.c.l.b16 %v436
        %v1016 = vunpack.c.h.b16 %v436
        %v1017 = vunpack.c.l.b16 %v437
        %v1018 = vunpack.c.l.b16 %v438
        %v1019 = vunpack.c.h.b16 %v438
        %v1020 = vunpack.c.l.b16 %v439
        %v1021 = vunpack.c.h.b16 %v439
        %v1022 = vunpack.c.l.b16 %v440
        %v1023 = vunpack.c.h.b16 %v440
        %v1024 = vunpack.c.l.b16 %v441
        %v1025 = vunpack.c.h.b16 %v441
        %v1026 = vunpack.c.l.b16 %v442
        %v1027 = vunpack.c.l.b16 %v443
        %v1028 = vunpack.c.h.b16 %v443
        %v1029 = vunpack.c.l.b16 %v444
        %v1030 = vunpack.c.h.b16 %v444
        %v1031 = vunpack.c.l.b16 %v445
        %v1032 = vunpack.c.h.b16 %v445
        %v1033 = vunpack.c.l.b16 %v446
        %v1034 = vunpack.c.h.b16 %v446
        %v1035 = vunpack.c.l.b16 %v447
        %v1036 = vunpack.c.l.b16 %v448
        %v1037 = vunpack.c.h.b16 %v448
        %v1038 = vunpack.c.l.b16 %v449
        %v1039 = vunpack.c.h.b16 %v449
        %v1040 = vunpack.c.l.b16 %v450
        %v1041 = vunpack.c.h.b16 %v450
        %v1042 = vunpack.c.l.b16 %v451
        %v1043 = vunpack.c.h.b16 %v451
        %v1044 = vunpack.c.l.b16 %v452
        %v1045 = vunpack.c.l.b16 %v453
        %v1046 = vunpack.c.h.b16 %v453
        %v1047 = vunpack.c.l.b16 %v454
        %v1048 = vunpack.c.h.b16 %v454
        %v1049 = vunpack.c.l.b16 %v455
        %v1050 = vunpack.c.h.b16 %v455
        %v1051 = vunpack.c.l.b16 %v456
        %v1052 = vunpack.c.h.b16 %v456
        %v1053 = vunpack.c.l.b16 %v457
        %v1054 = vunpack.c.l.b16 %v458
        %v1055 = vunpack.c.h.b16 %v458
        %v1056 = vunpack.c.l.b16 %v459
        %v1057 = vunpack.c.h.b16 %v459
        %v1058 = vunpack.c.l.b16 %v460
        %v1059 = vunpack.c.h.b16 %v460
        %v1060 = vunpack.c.l.b16 %v461
        %v1061 = vunpack.c.h.b16 %v461
        %v1062 = vunpack.c.l.b16 %v462
        %v1063 = vunpack.c.l.b16 %v463
        %v1064 = vunpack.c.h.b16 %v463
        %v1065 = vunpack.c.l.b16 %v464
        %v1066 = vunpack.c.h.b16 %v464
        %v1067 = vunpack.c.l.b16 %v465
        %v1068 = vunpack.c.h.b16 %v465
        %v1069 = vunpack.c.l.b16 %v466
        %v1070 = vunpack.c.h.b16 %v466
        %v1071 = vunpack.c.l.b16 %v467
        %v1072 = vunpack.c.l.b16 %v468
        %v1073 = vunpack.c.h.b16 %v468
        %v1074 = vunpack.c.l.b16 %v469
        %v1075 = vunpack.c.h.b16 %v469
        %v1076 = vunpack.c.l.b16 %v470
        %v1077 = vunpack.c.h.b16 %v470
        %v1078 = vunpack.c.l.b16 %v471
        %v1079 = vunpack.c.h.b16 %v471
        %v1080 = vunpack.c.l.b16 %v472
        %v1081 = vunpack.c.l.b16 %v473
        %v1082 = vunpack.c.h.b16 %v473
        %v1083 = vunpack.c.l.b16 %v474
        %v1084 = vunpack.c.h.b16 %v474
        %v1085 = vunpack.c.l.b16 %v475
        %v1086 = vunpack.c.h.b16 %v475
        %v1087 = vunpack.c.l.b16 %v476
        %v1088 = vunpack.c.h.b16 %v476
        %v1089 = vunpack.c.l.b16 %v477
        %v1090 = vunpack.c.l.b16 %v478
        %v1091 = vunpack.c.h.b16 %v478
        %v1092 = vunpack.c.l.b16 %v479
        %v1093 = vunpack.c.h.b16 %v479
        %v1094 = vunpack.c.l.b16 %v480
        %v1095 = vunpack.c.h.b16 %v480
        %v1096 = vunpack.c.l.b16 %v481
        %v1097 = vunpack.c.h.b16 %v481
        %v1098 = vunpack.c.l.b16 %v482
        %v1099 = vunpack.c.l.b16 %v483
        %v1100 = vunpack.c.h.b16 %v483
        %v1101 = vunpack.c.l.b16 %v484
        %v1102 = vunpack.c.h.b16 %v484
        %v1103 = vunpack.c.l.b16 %v485
        %v1104 = vunpack.c.h.b16 %v485
        %v1105 = vunpack.c.l.b16 %v486
        %v1106 = vunpack.c.h.b16 %v486
        %v1107 = vunpack.c.l.b16 %v487
        %v1108 = vunpack.c.l.b16 %v488
        %v1109 = vunpack.c.h.b16 %v488
        %v1110 = vunpack.c.l.b16 %v489
        %v1111 = vunpack.c.h.b16 %v489
        %v1112 = vunpack.c.l.b16 %v490
        %v1113 = vunpack.c.h.b16 %v490
        %v1114 = vunpack.c.l.b16 %v491
        %v1115 = vunpack.c.h.b16 %v491
        %v1116 = vunpack.c.l.b16 %v492
        %v1117 = vunpack.c.l.b16 %v493
        %v1118 = vunpack.c.h.b16 %v493
        %v1119 = vunpack.c.l.b16 %v494
        %v1120 = vunpack.c.h.b16 %v494
        %v1121 = vunpack.c.l.b16 %v495
        %v1122 = vunpack.c.h.b16 %v495
        %v1123 = vunpack.c.l.b16 %v496
        %v1124 = vunpack.c.h.b16 %v496
        %v1125 = vunpack.c.l.b16 %v497
        %v1126 = vunpack.c.l.b16 %v498
        %v1127 = vunpack.c.h.b16 %v498
        %v1128 = vunpack.c.l.b16 %v499
        %v1129 = vunpack.c.h.b16 %v499
        %v1130 = vunpack.c.l.b16 %v500
        %v1131 = vunpack.c.h.b16 %v500
        %v1132 = vunpack.c.l.b16 %v501
        %v1133 = vunpack.c.h.b16 %v501
        %v1134 = vunpack.c.l.b16 %v502
        %v1135 = vunpack.c.l.b16 %v503
        %v1136 = vunpack.c.h.b16 %v503
        %v1137 = vunpack.c.l.b16 %v504
        %v1138 = vunpack.c.h.b16 %v504
        %v1139 = vunpack.c.l.b16 %v505
        %v1140 = vunpack.c.h.b16 %v505
        %v1141 = vunpack.c.l.b16 %v506
        %v1142 = vunpack.c.h.b16 %v506
        %v1143 = vunpack.c.l.b16 %v507
        %v1144 = vunpack.c.l.b16 %v508
        %v1145 = vunpack.c.h.b16 %v508
        %v1146 = vunpack.c.l.b16 %v509
        %v1147 = vunpack.c.h.b16 %v509
        %v1148 = vunpack.c.l.b16 %v510
        %v1149 = vunpack.c.h.b16 %v510
        %v1150 = vunpack.c.l.b16 %v511
        %v1151 = vunpack.c.h.b16 %v511
        %v1152 = vunpack.c.l.b16 %v512
        %v1153 = vunpack.c.l.b16 %v513
        %v1154 = vunpack.c.h.b16 %v513
        %v1155 = vunpack.c.l.b16 %v514
        %v1156 = vunpack.c.h.b16 %v514
        %v1157 = vunpack.c.l.b16 %v515
        %v1158 = vunpack.c.h.b16 %v515
        %v1159 = vunpack.c.l.b16 %v516
        %v1160 = vunpack.c.h.b16 %v516
        %v1161 = vunpack.c.l.b16 %v517
        %v1162 = vunpack.c.l.b16 %v518
        %v1163 = vunpack.c.h.b16 %v518
        %v1164 = vunpack.c.l.b16 %v519
        %v1165 = vunpack.c.h.b16 %v519
        %v1166 = vunpack.c.l.b16 %v520
        %v1167 = vunpack.c.h.b16 %v520
        %v1168 = vunpack.c.l.b16 %v521
        %v1169 = vunpack.c.h.b16 %v521
        %v1170 = vunpack.c.l.b16 %v522
        %v1171 = vunpack.c.l.b16 %v523
        %v1172 = vunpack.c.h.b16 %v523
        %v1173 = vunpack.c.l.b16 %v524
        %v1174 = vunpack.c.h.b16 %v524
        %v1175 = vunpack.c.l.b16 %v525
        %v1176 = vunpack.c.h.b16 %v525
        %v1177 = vunpack.c.l.b16 %v526
        %v1178 = vunpack.c.h.b16 %v526
        %v1179 = vunpack.c.l.b16 %v527
        %v1180 = vunpack.c.l.b16 %v528
        %v1181 = vunpack.c.h.b16 %v528
        %v1182 = vunpack.c.l.b16 %v529
        %v1183 = vunpack.c.h.b16 %v529
        %v1184 = vunpack.c.l.b16 %v530
        %v1185 = vunpack.c.h.b16 %v530
        %v1186 = vunpack.c.l.b16 %v531
        %v1187 = vunpack.c.h.b16 %v531
        %v1188 = vunpack.c.l.b16 %v532
        %v1189 = vunpack.c.l.b16 %v533
        %v1190 = vunpack.c.h.b16 %v533
        %v1191 = vunpack.c.l.b16 %v534
        %v1192 = vunpack.c.h.b16 %v534
        %v1193 = vunpack.c.l.b16 %v535
        %v1194 = vunpack.c.h.b16 %v535
        %v1195 = vunpack.c.l.b16 %v536
        %v1196 = vunpack.c.h.b16 %v536
        %v1197 = vunpack.c.l.b16 %v537
        %v1198 = vunpack.c.l.b16 %v538
        %v1199 = vunpack.c.h.b16 %v538
        %v1200 = vunpack.c.l.b16 %v539
        %v1201 = vunpack.c.h.b16 %v539
        %v1202 = vunpack.c.l.b16 %v540
        %v1203 = vunpack.c.h.b16 %v540
        %v1204 = vunpack.c.l.b16 %v541
        %v1205 = vunpack.c.h.b16 %v541
        %v1206 = vunpack.c.l.b16 %v542
        %v1207 = vunpack.c.l.b16 %v543
        %v1208 = vunpack.c.h.b16 %v543
        %v1209 = vunpack.c.l.b16 %v544
        %v1210 = vunpack.c.h.b16 %v544
        %v1211 = vunpack.c.l.b16 %v545
        %v1212 = vunpack.c.h.b16 %v545
        %v1213 = vunpack.c.l.b16 %v546
        %v1214 = vunpack.c.h.b16 %v546
        %v1215 = vunpack.c.l.b16 %v547
        %v1216 = vunpack.c.l.b16 %v548
        %v1217 = vunpack.c.h.b16 %v548
        %v1218 = vunpack.c.l.b16 %v549
        %v1219 = vunpack.c.h.b16 %v549
        %v1220 = vunpack.c.l.b16 %v550
        %v1221 = vunpack.c.h.b16 %v550
        %v1222 = vunpack.c.l.b16 %v551
        %v1223 = vunpack.c.h.b16 %v551
        %v1224 = vunpack.c.l.b16 %v552
        %v1225 = vpack.c.b16 %v802, %v793
        %v1226 = vpack.c.b16 %v803, %v794
        %v1227 = vpack.c.b16 %v804, %v795
        %v1228 = vpack.c.b16 %v805, %v796
        %v1229 = vpack.c.b16 %v806, %v797
        %v1230 = vpack.c.b16 %v807, %v798
        %v1231 = vpack.c.b16 %v808, %v799
        %v1232 = vpack.c.b16 %v809, %v800
        %v1233 = vpack.c.b16 %v810, %v801
        %v1234 = vpack.c.b16 %v820, %v811
        %v1235 = vpack.c.b16 %v821, %v812
        %v1236 = vpack.c.b16 %v822, %v813
        %v1237 = vpack.c.b16 %v823, %v814
        %v1238 = vpack.c.b16 %v824, %v815
        %v1239 = vpack.c.b16 %v825, %v816
        %v1240 = vpack.c.b16 %v826, %v817
        %v1241 = vpack.c.b16 %v827, %v818
        %v1242 = vpack.c.b16 %v828, %v819
        %v1243 = vpack.c.b16 %v838, %v829
        %v1244 = vpack.c.b16 %v839, %v830
        %v1245 = vpack.c.b16 %v840, %v831
        %v1246 = vpack.c.b16 %v841, %v832
        %v1247 = vpack.c.b16 %v842, %v833
        %v1248 = vpack.c.b16 %v843, %v834
        %v1249 = vpack.c.b16 %v844, %v835
        %v1250 = vpack.c.b16 %v845, %v836
        %v1251 = vpack.c.b16 %v846, %v837
        %v1252 = vpack.c.b16 %v856, %v847
        %v1253 = vpack.c.b16 %v857, %v848
        %v1254 = vpack.c.b16 %v858, %v849
        %v1255 = vpack.c.b16 %v859, %v850
        %v1256 = vpack.c.b16 %v860, %v851
        %v1257 = vpack.c.b16 %v861, %v852
        %v1258 = vpack.c.b16 %v862, %v853
        %v1259 = vpack.c.b16 %v863, %v854
        %v1260 = vpack.c.b16 %v864, %v855
        %v1261 = vpack.c.b16 %v874, %v865
        %v1262 = vpack.c.b16 %v875, %v866
        %v1263 = vpack.c.b16 %v876, %v867
        %v1264 = vpack.c.b16 %v877, %v868
        %v1265 = vpack.c.b16 %v878, %v869
        %v1266 = vpack.c.b16 %v879, %v870
        %v1267 = vpack.c.b16 %v880, %v871
        %v1268 = vpack.c.b16 %v881, %v872
        %v1269 = vpack.c.b16 %v882, %v873
        %v1270 = vpack.c.b16 %v892, %v883
        %v1271 = vpack.c.b16 %v893, %v884
        %v1272 = vpack.c.b16 %v894, %v885
        %v1273 = vpack.c.b16 %v895, %v886
        %v1274 = vpack.c.b16 %v896, %v887
        %v1275 = vpack.c.b16 %v897, %v888
        %v1276 = vpack.c.b16 %v898, %v889
        %v1277 = vpack.c.b16 %v899, %v890
        %v1278 = vpack.c.b16 %v900, %v891
        %v1279 = vpack.c.b16 %v910, %v901
        %v1280 = vpack.c.b16 %v911, %v902
        %v1281 = vpack.c.b16 %v912, %v903
        %v1282 = vpack.c.b16 %v913, %v904
        %v1283 = vpack.c.b16 %v914, %v905
        %v1284 = vpack.c.b16 %v915, %v906
        %v1285 = vpack.c.b16 %v916, %v907
        %v1286 = vpack.c.b16 %v917, %v908
        %v1287 = vpack.c.b16 %v918, %v909
        %v1288 = vpack.c.b16 %v928, %v919
        %v1289 = vpack.c.b16 %v929, %v920
        %v1290 = vpack.c.b16 %v930, %v921
        %v1291 = vpack.c.b16 %v931, %v922
        %v1292 = vpack.c.b16 %v932, %v923
        %v1293 = vpack.c.b16 %v933, %v924
        %v1294 = vpack.c.b16 %v934, %v925
        %v1295 = vpack.c.b16 %v935, %v926
        %v1296 = vpack.c.b16 %v936, %v927
        %v1297 = vpack.c.b16 %v946, %v937
        %v1298 = vpack.c.b16 %v947, %v938
        %v1299 = vpack.c.b16 %v948, %v939
        %v1300 = vpack.c.b16 %v949, %v940
        %v1301 = vpack.c.b16 %v950, %v941
        %v1302 = vpack.c.b16 %v951, %v942
        %v1303 = vpack.c.b16 %v952, %v943
        %v1304 = vpack.c.b16 %v953, %v944
        %v1305 = vpack.c.b16 %v954, %v945
        %v1306 = vpack.c.b16 %v964, %v955
        %v1307 = vpack.c.b16 %v965, %v956
        %v1308 = vpack.c.b16 %v966, %v957
        %v1309 = vpack.c.b16 %v967, %v958
        %v1310 = vpack.c.b16 %v968, %v959
        %v1311 = vpack.c.b16 %v969, %v960
        %v1312 = vpack.c.b16 %v970, %v961
        %v1313 = vpack.c.b16 %v971, %v962
        %v1314 = vpack.c.b16 %v972, %v963
        %v1315 = vpack.c.b16 %v982, %v973
        %v1316 = vpack.c.b16 %v983, %v974
        %v1317 = vpack.c.b16 %v984, %v975
        %v1318 = vpack.c.b16 %v985, %v976
        %v1319 = vpack.c.b16 %v986, %v977
        %v1320 = vpack.c.b16 %v987, %v978
        %v1321 = vpack.c.b16 %v988, %v979
        %v1322 = vpack.c.b16 %v989, %v980
        %v1323 = vpack.c.b16 %v990, %v981
        %v1324 = vpack.c.b16 %v1000, %v991
        %v1325 = vpack.c.b16 %v1001, %v992
        %v1326 = vpack.c.b16 %v1002, %v993
        %v1327 = vpack.c.b16 %v1003, %v994
        %v1328 = vpack.c.b16 %v1004, %v995
        %v1329 = vpack.c.b16 %v1005, %v996
        %v1330 = vpack.c.b16 %v1006, %v997
        %v1331 = vpack.c.b16 %v1007, %v998
        %v1332 = vpack.c.b16 %v1008, %v999
        %v1333 = vpack.c.b16 %v1018, %v1009
        %v1334 = vpack.c.b16 %v1019, %v1010
        %v1335 = vpack.c.b16 %v1020, %v1011
        %v1336 = vpack.c.b16 %v1021, %v1012
        %v1337 = vpack.c.b16 %v1022, %v1013
        %v1338 = vpack.c.b16 %v1023, %v1014
        %v1339 = vpack.c.b16 %v1024, %v1015
        %v1340 = vpack.c.b16 %v1025, %v1016
        %v1341 = vpack.c.b16 %v1026, %v1017
        %v1342 = vpack.c.b16 %v1036, %v1027
        %v1343 = vpack.c.b16 %v1037, %v1028
        %v1344 = vpack.c.b16 %v1038, %v1029
        %v1345 = vpack.c.b16 %v1039, %v1030
        %v1346 = vpack.c.b16 %v1040, %v1031
        %v1347 = vpack.c.b16 %v1041, %v1032
        %v1348 = vpack.c.b16 %v1042, %v1033
        %v1349 = vpack.c.b16 %v1043, %v1034
        %v1350 = vpack.c.b16 %v1044, %v1035
        %v1351 = vpack.c.b16 %v1054, %v1045
        %v1352 = vpack.c.b16 %v1055, %v1046
        %v1353 = vpack.c.b16 %v1056, %v1047
        %v1354 = vpack.c.b16 %v1057, %v1048
        %v1355 = vpack.c.b16 %v1058, %v1049
        %v1356 = vpack.c.b16 %v1059, %v1050
        %v1357 = vpack.c.b16 %v1060, %v1051
        %v1358 = vpack.c.b16 %v1061, %v1052
        %v1359 = vpack.c.b16 %v1062, %v1053
        %v1360 = vpack.c.b16 %v1072, %v1063
        %v1361 = vpack.c.b16 %v1073, %v1064
        %v1362 = vpack.c.b16 %v1074, %v1065
        %v1363 = vpack.c.b16 %v1075, %v1066
        %v1364 = vpack.c.b16 %v1076, %v1067
        %v1365 = vpack.c.b16 %v1077, %v1068
        %v1366 = vpack.c.b16 %v1078, %v1069
        %v1367 = vpack.c.b16 %v1079, %v1070
        %v1368 = vpack.c.b16 %v1080, %v1071
        %v1369 = vpack.c.b16 %v1090, %v1081
        %v1370 = vpack.c.b16 %v1091, %v1082
        %v1371 = vpack.c.b16 %v1092, %v1083
        %v1372 = vpack.c.b16 %v1093, %v1084
        %v1373 = vpack.c.b16 %v1094, %v1085
        %v1374 = vpack.c.b16 %v1095, %v1086
        %v1375 = vpack.c.b16 %v1096, %v1087
        %v1376 = vpack.c.b16 %v1097, %v1088
        %v1377 = vpack.c.b16 %v1098, %v1089
        %v1378 = vpack.c.b16 %v1108, %v1099
        %v1379 = vpack.c.b16 %v1109, %v1100
        %v1380 = vpack.c.b16 %v1110, %v1101
        %v1381 = vpack.c.b16 %v1111, %v1102
        %v1382 = vpack.c.b16 %v1112, %v1103
        %v1383 = vpack.c.b16 %v1113, %v1104
        %v1384 = vpack.c.b16 %v1114, %v1105
        %v1385 = vpack.c.b16 %v1115, %v1106
        %v1386 = vpack.c.b16 %v1116, %v1107
        %v1387 = vpack.c.b16 %v1126, %v1117
        %v1388 = vpack.c.b16 %v1127, %v1118
        %v1389 = vpack.c.b16 %v1128, %v1119
        %v1390 = vpack.c.b16 %v1129, %v1120
        %v1391 = vpack.c.b16 %v1130, %v1121
        %v1392 = vpack.c.b16 %v1131, %v1122
        %v1393 = vpack.c.b16 %v1132, %v1123
        %v1394 = vpack.c.b16 %v1133, %v1124
        %v1395 = vpack.c.b16 %v1134, %v1125
        %v1396 = vpack.c.b16 %v1144, %v1135
        %v1397 = vpack.c.b16 %v1145, %v1136
        %v1398 = vpack.c.b16 %v1146, %v1137
        %v1399 = vpack.c.b16 %v1147, %v1138
        %v1400 = vpack.c.b16 %v1148, %v1139
        %v1401 = vpack.c.b16 %v1149, %v1140
        %v1402 = vpack.c.b16 %v1150, %v1141
        %v1403 = vpack.c.b16 %v1151, %v1142
        %v1404 = vpack.c.b16 %v1152, %v1143
        %v1405 = vpack.c.b16 %v1162, %v1153
        %v1406 = vpack.c.b16 %v1163, %v1154
        %v1407 = vpack.c.b16 %v1164, %v1155
        %v1408 = vpack.c.b16 %v1165, %v1156
        %v1409 = vpack.c.b16 %v1166, %v1157
        %v1410 = vpack.c.b16 %v1167, %v1158
        %v1411 = vpack.c.b16 %v1168, %v1159
        %v1412 = vpack.c.b16 %v1169, %v1160
        %v1413 = vpack.c.b16 %v1170, %v1161
        %v1414 = vpack.c.b16 %v1180, %v1171
        %v1415 = vpack.c.b16 %v1181, %v1172
        %v1416 = vpack.c.b16 %v1182, %v1173
        %v1417 = vpack.c.b16 %v1183, %v1174
        %v1418 = vpack.c.b16 %v1184, %v1175
        %v1419 = vpack.c.b16 %v1185, %v1176
        %v1420 = vpack.c.b16 %v1186, %v1177
        %v1421 = vpack.c.b16 %v1187, %v1178
        %v1422 = vpack.c.b16 %v1188, %v1179
        %v1423 = vpack.c.b16 %v1198, %v1189
        %v1424 = vpack.c.b16 %v1199, %v1190
        %v1425 = vpack.c.b16 %v1200, %v1191
        %v1426 = vpack.c.b16 %v1201, %v1192
        %v1427 = vpack.c.b16 %v1202, %v1193
        %v1428 = vpack.c.b16 %v1203, %v1194
        %v1429 = vpack.c.b16 %v1204, %v1195
        %v1430 = vpack.c.b16 %v1205, %v1196
        %v1431 = vpack.c.b16 %v1206, %v1197
        %v1432 = vpack.c.b16 %v1216, %v1207
        %v1433 = vpack.c.b16 %v1217, %v1208
        %v1434 = vpack.c.b16 %v1218, %v1209
        %v1435 = vpack.c.b16 %v1219, %v1210
        %v1436 = vpack.c.b16 %v1220, %v1211
        %v1437 = vpack.c.b16 %v1221, %v1212
        %v1438 = vpack.c.b16 %v1222, %v1213
        %v1439 = vpack.c.b16 %v1223, %v1214
        %v1440 = vpack.c.b16 %v1224, %v1215
        %1657 = vmatprep.subr.bf16.mxu0 %v1289
        %1658 = vmatpush1.bf16.msra.mxu0 %v1288
        %1659 = vmatprep.subr.bf16.mxu0 %v1280
        %1660 = vmatpush1.bf16.msra.mxu0 %v1279
        %1661 = vmatprep.subr.bf16.mxu0 %v1271
        %1662 = vmatpush1.bf16.msra.mxu0 %v1270
        %1663 = vmatprep.subr.bf16.mxu0 %v1262
        %1664 = vmatpush1.bf16.msra.mxu0 %v1261
        %1665 = vmatprep.subr.bf16.mxu0 %v1253
        %1666 = vmatpush1.bf16.msra.mxu0 %v1252
        %1667 = vmatprep.subr.bf16.mxu0 %v1244
        %1668 = vmatpush1.bf16.msra.mxu0 %v1243
        %1669 = vmatprep.subr.bf16.mxu0 %v1235
        %1670 = vmatpush1.bf16.msra.mxu0 %v1234
        %1671 = vmatprep.subr.bf16.mxu0 %v1226
        %1672 = vmatpush1.bf16.msra.mxu0 %v1225
        %1673 = vmatprep.subr.bf16.mxu0 %v1361
        %1674 = vmatpush2.bf16.msra.mxu0 %v1360
        %1675 = vmatprep.subr.bf16.mxu0 %v1352
        %1676 = vmatpush2.bf16.msra.mxu0 %v1351
        %1677 = vmatprep.subr.bf16.mxu0 %v1343
        %1678 = vmatpush2.bf16.msra.mxu0 %v1342
        %1679 = vmatprep.subr.bf16.mxu0 %v1334
        %1680 = vmatpush2.bf16.msra.mxu0 %v1333
        %1681 = vmatprep.subr.bf16.mxu0 %v1325
        %1682 = vmatpush2.bf16.msra.mxu0 %v1324
        %1683 = vmatprep.subr.bf16.mxu0 %v1316
        %1684 = vmatpush2.bf16.msra.mxu0 %v1315
        %1685 = vmatprep.subr.bf16.mxu0 %v1307
        %1686 = vmatpush2.bf16.msra.mxu0 %v1306
        %1687 = vmatprep.subr.bf16.mxu0 %v1298
        %1688 = vmatpush2.bf16.msra.mxu0 %v1297
        %1689 = vmatprep.mubr.bf16.mxu0 %v311
        %1690 = vmatmul.mubr.bf16.gmra.mxu0 %v310
        %v1691 = vpop.f32.mrf.mxu0
        %v1692 = vadd.f32 0.0, %v1691
        %v1693 = vpop.f32.mrf.mxu0
        %v1694 = vadd.f32 0.0, %v1693
        %v1695 = vpop.f32.mrf.mxu0
        %v1696 = vadd.f32 0.0, %v1695
        %v1697 = vpop.f32.mrf.mxu0
        %v1698 = vadd.f32 0.0, %v1697
        %1699 = vdwg.mxu0
        %1700 = vmatprep.subr.bf16.mxu0 %v1433
        %1701 = vmatpush1.bf16.msra.mxu0 %v1432
        %1702 = vmatprep.subr.bf16.mxu0 %v1424
        %1703 = vmatpush1.bf16.msra.mxu0 %v1423
        %1704 = vmatprep.subr.bf16.mxu0 %v1415
        %1705 = vmatpush1.bf16.msra.mxu0 %v1414
        %1706 = vmatprep.subr.bf16.mxu0 %v1406
        %1707 = vmatpush1.bf16.msra.mxu0 %v1405
        %1708 = vmatprep.subr.bf16.mxu0 %v1397
        %1709 = vmatpush1.bf16.msra.mxu0 %v1396
        %1710 = vmatprep.subr.bf16.mxu0 %v1388
        %1711 = vmatpush1.bf16.msra.mxu0 %v1387
        %1712 = vmatprep.subr.bf16.mxu0 %v1379
        %1713 = vmatpush1.bf16.msra.mxu0 %v1378
        %1714 = vmatprep.subr.bf16.mxu0 %v1370
        %1715 = vmatpush1.bf16.msra.mxu0 %v1369
        %1716 = vmatprep.subr.bf16.mxu0 0
        %1717 = vmatpush2.bf16.msra.mxu0 0
        %1718 = vmatprep.subr.bf16.mxu0 0
        %1719 = vmatpush2.bf16.msra.mxu0 0
        %1720 = vmatprep.subr.bf16.mxu0 0
        %1721 = vmatpush2.bf16.msra.mxu0 0
        %1722 = vmatprep.subr.bf16.mxu0 0
        %1723 = vmatpush2.bf16.msra.mxu0 0
        %1724 = vmatprep.subr.bf16.mxu0 0
        %1725 = vmatpush2.bf16.msra.mxu0 0
        %1726 = vmatprep.subr.bf16.mxu0 0
        %1727 = vmatpush2.bf16.msra.mxu0 0
        %1728 = vmatprep.subr.bf16.mxu0 0
        %1729 = vmatpush2.bf16.msra.mxu0 0
        %1730 = vmatprep.subr.bf16.mxu0 0
        %1731 = vmatpush2.bf16.msra.mxu0 0
        %1732 = vmatprep.mubr.bf16.mxu0 0
        %1733 = vmatmul.mubr.bf16.gmra.mxu0 %v312
        %v1734 = vpop.f32.mrf.mxu0
        %v1735 = vadd.f32 %v1692, %v1734
        %v1736 = vpop.f32.mrf.mxu0
        %v1737 = vadd.f32 %v1694, %v1736
        %v1738 = vpop.f32.mrf.mxu0
        %v1739 = vadd.f32 %v1696, %v1738
        %v1740 = vpop.f32.mrf.mxu0
        %v1741 = vadd.f32 %v1698, %v1740
        %1742 = vdwg.mxu0
        %1743 = vmatprep.subr.bf16.mxu0 %v1291
        %1744 = vmatpush1.bf16.msra.mxu0 %v1290
        %1745 = vmatprep.subr.bf16.mxu0 %v1282
        %1746 = vmatpush1.bf16.msra.mxu0 %v1281
        %1747 = vmatprep.subr.bf16.mxu0 %v1273
        %1748 = vmatpush1.bf16.msra.mxu0 %v1272
        %1749 = vmatprep.subr.bf16.mxu0 %v1264
        %1750 = vmatpush1.bf16.msra.mxu0 %v1263
        %1751 = vmatprep.subr.bf16.mxu0 %v1255
        %1752 = vmatpush1.bf16.msra.mxu0 %v1254
        %1753 = vmatprep.subr.bf16.mxu0 %v1246
        %1754 = vmatpush1.bf16.msra.mxu0 %v1245
        %1755 = vmatprep.subr.bf16.mxu0 %v1237
        %1756 = vmatpush1.bf16.msra.mxu0 %v1236
        %1757 = vmatprep.subr.bf16.mxu0 %v1228
        %1758 = vmatpush1.bf16.msra.mxu0 %v1227
        %1759 = vmatprep.subr.bf16.mxu0 %v1363
        %1760 = vmatpush2.bf16.msra.mxu0 %v1362
        %1761 = vmatprep.subr.bf16.mxu0 %v1354
        %1762 = vmatpush2.bf16.msra.mxu0 %v1353
        %1763 = vmatprep.subr.bf16.mxu0 %v1345
        %1764 = vmatpush2.bf16.msra.mxu0 %v1344
        %1765 = vmatprep.subr.bf16.mxu0 %v1336
        %1766 = vmatpush2.bf16.msra.mxu0 %v1335
        %1767 = vmatprep.subr.bf16.mxu0 %v1327
        %1768 = vmatpush2.bf16.msra.mxu0 %v1326
        %1769 = vmatprep.subr.bf16.mxu0 %v1318
        %1770 = vmatpush2.bf16.msra.mxu0 %v1317
        %1771 = vmatprep.subr.bf16.mxu0 %v1309
        %1772 = vmatpush2.bf16.msra.mxu0 %v1308
        %1773 = vmatprep.subr.bf16.mxu0 %v1300
        %1774 = vmatpush2.bf16.msra.mxu0 %v1299
        %1775 = vmatprep.mubr.bf16.mxu0 %v311
        %1776 = vmatmul.mubr.bf16.gmra.mxu0 %v310
        %v1777 = vpop.f32.mrf.mxu0
        %v1778 = vadd.f32 0.0, %v1777
        %v1779 = vpop.f32.mrf.mxu0
        %v1780 = vadd.f32 0.0, %v1779
        %v1781 = vpop.f32.mrf.mxu0
        %v1782 = vadd.f32 0.0, %v1781
        %v1783 = vpop.f32.mrf.mxu0
        %v1784 = vadd.f32 0.0, %v1783
        %1785 = vdwg.mxu0
        %1786 = vmatprep.subr.bf16.mxu0 %v1435
        %1787 = vmatpush1.bf16.msra.mxu0 %v1434
        %1788 = vmatprep.subr.bf16.mxu0 %v1426
        %1789 = vmatpush1.bf16.msra.mxu0 %v1425
        %1790 = vmatprep.subr.bf16.mxu0 %v1417
        %1791 = vmatpush1.bf16.msra.mxu0 %v1416
        %1792 = vmatprep.subr.bf16.mxu0 %v1408
        %1793 = vmatpush1.bf16.msra.mxu0 %v1407
        %1794 = vmatprep.subr.bf16.mxu0 %v1399
        %1795 = vmatpush1.bf16.msra.mxu0 %v1398
        %1796 = vmatprep.subr.bf16.mxu0 %v1390
        %1797 = vmatpush1.bf16.msra.mxu0 %v1389
        %1798 = vmatprep.subr.bf16.mxu0 %v1381
        %1799 = vmatpush1.bf16.msra.mxu0 %v1380
        %1800 = vmatprep.subr.bf16.mxu0 %v1372
        %1801 = vmatpush1.bf16.msra.mxu0 %v1371
        %1802 = vmatprep.subr.bf16.mxu0 0
        %1803 = vmatpush2.bf16.msra.mxu0 0
        %1804 = vmatprep.subr.bf16.mxu0 0
        %1805 = vmatpush2.bf16.msra.mxu0 0
        %1806 = vmatprep.subr.bf16.mxu0 0
        %1807 = vmatpush2.bf16.msra.mxu0 0
        %1808 = vmatprep.subr.bf16.mxu0 0
        %1809 = vmatpush2.bf16.msra.mxu0 0
        %1810 = vmatprep.subr.bf16.mxu0 0
        %1811 = vmatpush2.bf16.msra.mxu0 0
        %1812 = vmatprep.subr.bf16.mxu0 0
        %1813 = vmatpush2.bf16.msra.mxu0 0
        %1814 = vmatprep.subr.bf16.mxu0 0
        %1815 = vmatpush2.bf16.msra.mxu0 0
        %1816 = vmatprep.subr.bf16.mxu0 0
        %1817 = vmatpush2.bf16.msra.mxu0 0
        %1818 = vmatprep.mubr.bf16.mxu0 0
        %1819 = vmatmul.mubr.bf16.gmra.mxu0 %v312
        %v1820 = vpop.f32.mrf.mxu0
        %v1821 = vadd.f32 %v1778, %v1820
        %v1822 = vpop.f32.mrf.mxu0
        %v1823 = vadd.f32 %v1780, %v1822
        %v1824 = vpop.f32.mrf.mxu0
        %v1825 = vadd.f32 %v1782, %v1824
        %v1826 = vpop.f32.mrf.mxu0
        %v1827 = vadd.f32 %v1784, %v1826
        %1828 = vdwg.mxu0
        %1829 = vmatprep.subr.bf16.mxu0 %v1293
        %1830 = vmatpush1.bf16.msra.mxu0 %v1292
        %1831 = vmatprep.subr.bf16.mxu0 %v1284
        %1832 = vmatpush1.bf16.msra.mxu0 %v1283
        %1833 = vmatprep.subr.bf16.mxu0 %v1275
        %1834 = vmatpush1.bf16.msra.mxu0 %v1274
        %1835 = vmatprep.subr.bf16.mxu0 %v1266
        %1836 = vmatpush1.bf16.msra.mxu0 %v1265
        %1837 = vmatprep.subr.bf16.mxu0 %v1257
        %1838 = vmatpush1.bf16.msra.mxu0 %v1256
        %1839 = vmatprep.subr.bf16.mxu0 %v1248
        %1840 = vmatpush1.bf16.msra.mxu0 %v1247
        %1841 = vmatprep.subr.bf16.mxu0 %v1239
        %1842 = vmatpush1.bf16.msra.mxu0 %v1238
        %1843 = vmatprep.subr.bf16.mxu0 %v1230
        %1844 = vmatpush1.bf16.msra.mxu0 %v1229
        %1845 = vmatprep.subr.bf16.mxu0 %v1365
        %1846 = vmatpush2.bf16.msra.mxu0 %v1364
        %1847 = vmatprep.subr.bf16.mxu0 %v1356
        %1848 = vmatpush2.bf16.msra.mxu0 %v1355
        %1849 = vmatprep.subr.bf16.mxu0 %v1347
        %1850 = vmatpush2.bf16.msra.mxu0 %v1346
        %1851 = vmatprep.subr.bf16.mxu0 %v1338
        %1852 = vmatpush2.bf16.msra.mxu0 %v1337
        %1853 = vmatprep.subr.bf16.mxu0 %v1329
        %1854 = vmatpush2.bf16.msra.mxu0 %v1328
        %1855 = vmatprep.subr.bf16.mxu0 %v1320
        %1856 = vmatpush2.bf16.msra.mxu0 %v1319
        %1857 = vmatprep.subr.bf16.mxu0 %v1311
        %1858 = vmatpush2.bf16.msra.mxu0 %v1310
        %1859 = vmatprep.subr.bf16.mxu0 %v1302
        %1860 = vmatpush2.bf16.msra.mxu0 %v1301
        %1861 = vmatprep.mubr.bf16.mxu0 %v311
        %1862 = vmatmul.mubr.bf16.gmra.mxu0 %v310
        %v1863 = vpop.f32.mrf.mxu0
        %v1864 = vadd.f32 0.0, %v1863
        %v1865 = vpop.f32.mrf.mxu0
        %v1866 = vadd.f32 0.0, %v1865
        %v1867 = vpop.f32.mrf.mxu0
        %v1868 = vadd.f32 0.0, %v1867
        %v1869 = vpop.f32.mrf.mxu0
        %v1870 = vadd.f32 0.0, %v1869
        %1871 = vdwg.mxu0
        %1872 = vmatprep.subr.bf16.mxu0 %v1437
        %1873 = vmatpush1.bf16.msra.mxu0 %v1436
        %1874 = vmatprep.subr.bf16.mxu0 %v1428
        %1875 = vmatpush1.bf16.msra.mxu0 %v1427
        %1876 = vmatprep.subr.bf16.mxu0 %v1419
        %1877 = vmatpush1.bf16.msra.mxu0 %v1418
        %1878 = vmatprep.subr.bf16.mxu0 %v1410
        %1879 = vmatpush1.bf16.msra.mxu0 %v1409
        %1880 = vmatprep.subr.bf16.mxu0 %v1401
        %1881 = vmatpush1.bf16.msra.mxu0 %v1400
        %1882 = vmatprep.subr.bf16.mxu0 %v1392
        %1883 = vmatpush1.bf16.msra.mxu0 %v1391
        %1884 = vmatprep.subr.bf16.mxu0 %v1383
        %1885 = vmatpush1.bf16.msra.mxu0 %v1382
        %1886 = vmatprep.subr.bf16.mxu0 %v1374
        %1887 = vmatpush1.bf16.msra.mxu0 %v1373
        %1888 = vmatprep.subr.bf16.mxu0 0
        %1889 = vmatpush2.bf16.msra.mxu0 0
        %1890 = vmatprep.subr.bf16.mxu0 0
        %1891 = vmatpush2.bf16.msra.mxu0 0
        %1892 = vmatprep.subr.bf16.mxu0 0
        %1893 = vmatpush2.bf16.msra.mxu0 0
        %1894 = vmatprep.subr.bf16.mxu0 0
        %1895 = vmatpush2.bf16.msra.mxu0 0
        %1896 = vmatprep.subr.bf16.mxu0 0
        %1897 = vmatpush2.bf16.msra.mxu0 0
        %1898 = vmatprep.subr.bf16.mxu0 0
        %1899 = vmatpush2.bf16.msra.mxu0 0
        %1900 = vmatprep.subr.bf16.mxu0 0
        %1901 = vmatpush2.bf16.msra.mxu0 0
        %1902 = vmatprep.subr.bf16.mxu0 0
        %1903 = vmatpush2.bf16.msra.mxu0 0
        %1904 = vmatprep.mubr.bf16.mxu0 0
        %1905 = vmatmul.mubr.bf16.gmra.mxu0 %v312
        %v1906 = vpop.f32.mrf.mxu0
        %v1907 = vadd.f32 %v1864, %v1906
        %v1908 = vpop.f32.mrf.mxu0
        %v1909 = vadd.f32 %v1866, %v1908
        %v1910 = vpop.f32.mrf.mxu0
        %v1911 = vadd.f32 %v1868, %v1910
        %v1912 = vpop.f32.mrf.mxu0
        %v1913 = vadd.f32 %v1870, %v1912
        %1914 = vdwg.mxu0
        %1915 = vmatprep.subr.bf16.mxu0 %v1295
        %1916 = vmatpush1.bf16.msra.mxu0 %v1294
        %1917 = vmatprep.subr.bf16.mxu0 %v1286
        %1918 = vmatpush1.bf16.msra.mxu0 %v1285
        %1919 = vmatprep.subr.bf16.mxu0 %v1277
        %1920 = vmatpush1.bf16.msra.mxu0 %v1276
        %1921 = vmatprep.subr.bf16.mxu0 %v1268
        %1922 = vmatpush1.bf16.msra.mxu0 %v1267
        %1923 = vmatprep.subr.bf16.mxu0 %v1259
        %1924 = vmatpush1.bf16.msra.mxu0 %v1258
        %1925 = vmatprep.subr.bf16.mxu0 %v1250
        %1926 = vmatpush1.bf16.msra.mxu0 %v1249
        %1927 = vmatprep.subr.bf16.mxu0 %v1241
        %1928 = vmatpush1.bf16.msra.mxu0 %v1240
        %1929 = vmatprep.subr.bf16.mxu0 %v1232
        %1930 = vmatpush1.bf16.msra.mxu0 %v1231
        %1931 = vmatprep.subr.bf16.mxu0 %v1367
        %1932 = vmatpush2.bf16.msra.mxu0 %v1366
        %1933 = vmatprep.subr.bf16.mxu0 %v1358
        %1934 = vmatpush2.bf16.msra.mxu0 %v1357
        %1935 = vmatprep.subr.bf16.mxu0 %v1349
        %1936 = vmatpush2.bf16.msra.mxu0 %v1348
        %1937 = vmatprep.subr.bf16.mxu0 %v1340
        %1938 = vmatpush2.bf16.msra.mxu0 %v1339
        %1939 = vmatprep.subr.bf16.mxu0 %v1331
        %1940 = vmatpush2.bf16.msra.mxu0 %v1330
        %1941 = vmatprep.subr.bf16.mxu0 %v1322
        %1942 = vmatpush2.bf16.msra.mxu0 %v1321
        %1943 = vmatprep.subr.bf16.mxu0 %v1313
        %1944 = vmatpush2.bf16.msra.mxu0 %v1312
        %1945 = vmatprep.subr.bf16.mxu0 %v1304
        %1946 = vmatpush2.bf16.msra.mxu0 %v1303
        %1947 = vmatprep.mubr.bf16.mxu0 %v311
        %1948 = vmatmul.mubr.bf16.gmra.mxu0 %v310
        %v1949 = vpop.f32.mrf.mxu0
        %v1950 = vadd.f32 0.0, %v1949
        %v1951 = vpop.f32.mrf.mxu0
        %v1952 = vadd.f32 0.0, %v1951
        %v1953 = vpop.f32.mrf.mxu0
        %v1954 = vadd.f32 0.0, %v1953
        %v1955 = vpop.f32.mrf.mxu0
        %v1956 = vadd.f32 0.0, %v1955
        %1957 = vdwg.mxu0
        %1958 = vmatprep.subr.bf16.mxu0 %v1439
        %1959 = vmatpush1.bf16.msra.mxu0 %v1438
        %1960 = vmatprep.subr.bf16.mxu0 %v1430
        %1961 = vmatpush1.bf16.msra.mxu0 %v1429
        %1962 = vmatprep.subr.bf16.mxu0 %v1421
        %1963 = vmatpush1.bf16.msra.mxu0 %v1420
        %1964 = vmatprep.subr.bf16.mxu0 %v1412
        %1965 = vmatpush1.bf16.msra.mxu0 %v1411
        %1966 = vmatprep.subr.bf16.mxu0 %v1403
        %1967 = vmatpush1.bf16.msra.mxu0 %v1402
        %1968 = vmatprep.subr.bf16.mxu0 %v1394
        %1969 = vmatpush1.bf16.msra.mxu0 %v1393
        %1970 = vmatprep.subr.bf16.mxu0 %v1385
        %1971 = vmatpush1.bf16.msra.mxu0 %v1384
        %1972 = vmatprep.subr.bf16.mxu0 %v1376
        %1973 = vmatpush1.bf16.msra.mxu0 %v1375
        %1974 = vmatprep.subr.bf16.mxu0 0
        %1975 = vmatpush2.bf16.msra.mxu0 0
        %1976 = vmatprep.subr.bf16.mxu0 0
        %1977 = vmatpush2.bf16.msra.mxu0 0
        %1978 = vmatprep.subr.bf16.mxu0 0
        %1979 = vmatpush2.bf16.msra.mxu0 0
        %1980 = vmatprep.subr.bf16.mxu0 0
        %1981 = vmatpush2.bf16.msra.mxu0 0
        %1982 = vmatprep.subr.bf16.mxu0 0
        %1983 = vmatpush2.bf16.msra.mxu0 0
        %1984 = vmatprep.subr.bf16.mxu0 0
        %1985 = vmatpush2.bf16.msra.mxu0 0
        %1986 = vmatprep.subr.bf16.mxu0 0
        %1987 = vmatpush2.bf16.msra.mxu0 0
        %1988 = vmatprep.subr.bf16.mxu0 0
        %1989 = vmatpush2.bf16.msra.mxu0 0
        %1990 = vmatprep.mubr.bf16.mxu0 0
        %1991 = vmatmul.mubr.bf16.gmra.mxu0 %v312
        %v1992 = vpop.f32.mrf.mxu0
        %v1993 = vadd.f32 %v1950, %v1992
        %v1994 = vpop.f32.mrf.mxu0
        %v1995 = vadd.f32 %v1952, %v1994
        %v1996 = vpop.f32.mrf.mxu0
        %v1997 = vadd.f32 %v1954, %v1996
        %v1998 = vpop.f32.mrf.mxu0
        %v1999 = vadd.f32 %v1956, %v1998
        %2000 = vdwg.mxu0
        %2001 = vmatprep.subr.bf16.mxu0 0
        %2002 = vmatpush1.bf16.msra.mxu0 %v1296
        %2003 = vmatprep.subr.bf16.mxu0 0
        %2004 = vmatpush1.bf16.msra.mxu0 %v1287
        %2005 = vmatprep.subr.bf16.mxu0 0
        %2006 = vmatpush1.bf16.msra.mxu0 %v1278
        %2007 = vmatprep.subr.bf16.mxu0 0
        %2008 = vmatpush1.bf16.msra.mxu0 %v1269
        %2009 = vmatprep.subr.bf16.mxu0 0
        %2010 = vmatpush1.bf16.msra.mxu0 %v1260
        %2011 = vmatprep.subr.bf16.mxu0 0
        %2012 = vmatpush1.bf16.msra.mxu0 %v1251
        %2013 = vmatprep.subr.bf16.mxu0 0
        %2014 = vmatpush1.bf16.msra.mxu0 %v1242
        %2015 = vmatprep.subr.bf16.mxu0 0
        %2016 = vmatpush1.bf16.msra.mxu0 %v1233
        %2017 = vmatprep.subr.bf16.mxu0 0
        %2018 = vmatpush2.bf16.msra.mxu0 %v1368
        %2019 = vmatprep.subr.bf16.mxu0 0
        %2020 = vmatpush2.bf16.msra.mxu0 %v1359
        %2021 = vmatprep.subr.bf16.mxu0 0
        %2022 = vmatpush2.bf16.msra.mxu0 %v1350
        %2023 = vmatprep.subr.bf16.mxu0 0
        %2024 = vmatpush2.bf16.msra.mxu0 %v1341
        %2025 = vmatprep.subr.bf16.mxu0 0
        %2026 = vmatpush2.bf16.msra.mxu0 %v1332
        %2027 = vmatprep.subr.bf16.mxu0 0
        %2028 = vmatpush2.bf16.msra.mxu0 %v1323
        %2029 = vmatprep.subr.bf16.mxu0 0
        %2030 = vmatpush2.bf16.msra.mxu0 %v1314
        %2031 = vmatprep.subr.bf16.mxu0 0
        %2032 = vmatpush2.bf16.msra.mxu0 %v1305
        %2033 = vmatprep.mubr.bf16.mxu0 %v311
        %2034 = vmatmul.mubr.bf16.gmra.mxu0 %v310
        %v2035 = vpop.f32.mrf.mxu0
        %v2036 = vadd.f32 0.0, %v2035
        %v2037 = vpop.f32.mrf.mxu0
        %v2038 = vpop.f32.mrf.mxu0
        %v2039 = vadd.f32 0.0, %v2038
        %v2040 = vpop.f32.mrf.mxu0
        %2041 = vdwg.mxu0
        %2042 = vmatprep.subr.bf16.mxu0 0
        %2043 = vmatpush1.bf16.msra.mxu0 %v1440
        %2044 = vmatprep.subr.bf16.mxu0 0
        %2045 = vmatpush1.bf16.msra.mxu0 %v1431
        %2046 = vmatprep.subr.bf16.mxu0 0
        %2047 = vmatpush1.bf16.msra.mxu0 %v1422
        %2048 = vmatprep.subr.bf16.mxu0 0
        %2049 = vmatpush1.bf16.msra.mxu0 %v1413
        %2050 = vmatprep.subr.bf16.mxu0 0
        %2051 = vmatpush1.bf16.msra.mxu0 %v1404
        %2052 = vmatprep.subr.bf16.mxu0 0
        %2053 = vmatpush1.bf16.msra.mxu0 %v1395
        %2054 = vmatprep.subr.bf16.mxu0 0
        %2055 = vmatpush1.bf16.msra.mxu0 %v1386
        %2056 = vmatprep.subr.bf16.mxu0 0
        %2057 = vmatpush1.bf16.msra.mxu0 %v1377
        %2058 = vmatprep.subr.bf16.mxu0 0
        %2059 = vmatpush2.bf16.msra.mxu0 0
        %2060 = vmatprep.subr.bf16.mxu0 0
        %2061 = vmatpush2.bf16.msra.mxu0 0
        %2062 = vmatprep.subr.bf16.mxu0 0
        %2063 = vmatpush2.bf16.msra.mxu0 0
        %2064 = vmatprep.subr.bf16.mxu0 0
        %2065 = vmatpush2.bf16.msra.mxu0 0
        %2066 = vmatprep.subr.bf16.mxu0 0
        %2067 = vmatpush2.bf16.msra.mxu0 0
        %2068 = vmatprep.subr.bf16.mxu0 0
        %2069 = vmatpush2.bf16.msra.mxu0 0
        %2070 = vmatprep.subr.bf16.mxu0 0
        %2071 = vmatpush2.bf16.msra.mxu0 0
        %2072 = vmatprep.subr.bf16.mxu0 0
        %2073 = vmatpush2.bf16.msra.mxu0 0
        %2074 = vmatprep.mubr.bf16.mxu0 0
        %2075 = vmatmul.mubr.bf16.gmra.mxu0 %v312
        %v2076 = vpop.f32.mrf.mxu0
        %v2077 = vadd.f32 %v2036, %v2076
        %v2078 = vpop.f32.mrf.mxu0
        %v2079 = vpop.f32.mrf.mxu0
        %v2080 = vadd.f32 %v2039, %v2079
        %v2081 = vpop.f32.mrf.mxu0
        %2082 = vdwg.mxu0
        %v2083 = vpack.c.bf16 %v1739, %v1735
        %v2084 = vpack.c.bf16 %v1741, %v1737
        %v2085 = vpack.c.bf16 %v1825, %v1821
        %v2086 = vpack.c.bf16 %v1827, %v1823
        %v2087 = vpack.c.bf16 %v1911, %v1907
        %v2088 = vpack.c.bf16 %v1913, %v1909
        %v2089 = vpack.c.bf16 %v1997, %v1993
        %v2090 = vpack.c.bf16 %v1999, %v1995
        %v2091 = vpack.c.bf16 %v2080, %v2077
        %v2101 = vunpack.c.l.b16 %v2083
        %v2102 = vunpack.c.l.b16 %v2084
        %v2103 = vunpack.c.l.b16 %v2085
        %v2104 = vunpack.c.l.b16 %v2086
        %v2105 = vunpack.c.l.b16 %v2087
        %v2106 = vunpack.c.l.b16 %v2088
        %v2107 = vunpack.c.l.b16 %v2089
        %v2108 = vunpack.c.l.b16 %v2090
        %v2109 = vunpack.c.l.b16 %v2091
        %v2110 = vunpack.c.h.b16 %v2083
        %v2111 = vunpack.c.h.b16 %v2084
        %v2112 = vunpack.c.h.b16 %v2085
        %v2113 = vunpack.c.h.b16 %v2086
        %v2114 = vunpack.c.h.b16 %v2087
        %v2115 = vunpack.c.h.b16 %v2088
        %v2116 = vunpack.c.h.b16 %v2089
        %v2117 = vunpack.c.h.b16 %v2090
        %v2118 = vunpack.c.h.b16 %v2091
        %v2119 = vpack.c.b16 %v2102, %v2101
        %v2120 = vpack.c.b16 %v2104, %v2103
        %v2121 = vpack.c.b16 %v2106, %v2105
        %v2122 = vpack.c.b16 %v2108, %v2107
        %v2123 = vpack.c.b16 %v2109, %v2109
        %v2124 = vpack.c.b16 %v2111, %v2110
        %v2125 = vpack.c.b16 %v2113, %v2112
        %v2126 = vpack.c.b16 %v2115, %v2114
        %v2127 = vpack.c.b16 %v2117, %v2116
        %v2128 = vpack.c.b16 %v2118, %v2118
        %2139 = vst [vmem:[#allocation2] sm:$0xff] %v2119
        %2140 = vst [vmem:[#allocation2 + $0x8] sm:$0xff] %v2120
        %2141 = vst [vmem:[#allocation2 + $0x10] sm:$0xff] %v2121
        %2142 = vst [vmem:[#allocation2 + $0x18] sm:$0xff] %v2122
        %2143 = vst [vmem:[#allocation2 + $0x20] sm:$0xf] %v2123
        %2144 = vst [vmem:[#allocation2 + $0x24] sm:$0xff] %v2124
        %2145 = vst [vmem:[#allocation2 + $0x2c] sm:$0xff] %v2125
        %2146 = vst [vmem:[#allocation2 + $0x34] sm:$0xff] %v2126
        %2147 = vst [vmem:[#allocation2 + $0x3c] sm:$0xff] %v2127
        %2148 = vst [vmem:[#allocation2 + $0x44] sm:$0xf] %v2128
        %v2149 = vld [vmem:[#allocation10] sm:$0xff]
        %v2150 = vld [vmem:[#allocation10 + $0x8] sm:$0xff]
        %s2151 = smul.u32 0, 9
        %s2152 = smul.addr %s2151, 4
        %s2153 = scalar_lea.vmem [#allocation2], %s2152
        %v2154 = vld [vmem:[%s2153] sm:$0xf]
        %v2155 = vld [vmem:[%s2153 + $0x24] sm:$0xf]
        %v2156 = vld [vmem:[%s2153 + $0xc] sm:$0xf]
        %v2157 = vld [vmem:[%s2153 + $0x30] sm:$0xf]
        %v2160 = vunpack.c.l.b16 %v2154
        %v2161 = vunpack.c.l.b16 %v2155
        %v2162 = vpack.c.b16 %v2161, %v2160
        %v2166 = vunpack.c.l.b16 %v2156
        %v2167 = vunpack.c.l.b16 %v2157
        %v2168 = vpack.c.b16 %v2167, %v2166
        %2170 = vmatprep.subr.bf16.mxu0 0
        %2171 = vmatpush1.bf16.xpose.msra.mxu0 0
        %2172 = vmatprep.subr.bf16.mxu0 0
        %2173 = vmatpush1.bf16.xpose.msra.mxu0 0
        %2174 = vmatprep.subr.bf16.mxu0 0
        %2175 = vmatpush1.bf16.xpose.msra.mxu0 0
        %2176 = vmatprep.subr.bf16.mxu0 0
        %2177 = vmatpush1.bf16.xpose.msra.mxu0 0
        %2178 = vmatprep.subr.bf16.mxu0 0
        %2179 = vmatpush1.bf16.xpose.msra.mxu0 0
        %2180 = vmatprep.subr.bf16.mxu0 0
        %2181 = vmatpush1.bf16.xpose.msra.mxu0 0
        %2182 = vmatprep.subr.bf16.mxu0 0
        %2183 = vmatpush1.bf16.xpose.msra.mxu0 0
        %2184 = vmatprep.subr.bf16.mxu0 0
        %2185 = vmatpush1.bf16.xpose.msra.mxu0 %v2168
        %2186 = vmatprep.subr.bf16.mxu0 0
        %2187 = vmatpush2.bf16.xpose.msra.mxu0 0
        %2188 = vmatprep.subr.bf16.mxu0 0
        %2189 = vmatpush2.bf16.xpose.msra.mxu0 0
        %2190 = vmatprep.subr.bf16.mxu0 0
        %2191 = vmatpush2.bf16.xpose.msra.mxu0 0
        %2192 = vmatprep.subr.bf16.mxu0 0
        %2193 = vmatpush2.bf16.xpose.msra.mxu0 0
        %2194 = vmatprep.subr.bf16.mxu0 0
        %2195 = vmatpush2.bf16.xpose.msra.mxu0 0
        %2196 = vmatprep.subr.bf16.mxu0 0
        %2197 = vmatpush2.bf16.xpose.msra.mxu0 0
        %2198 = vmatprep.subr.bf16.mxu0 0
        %2199 = vmatpush2.bf16.xpose.msra.mxu0 0
        %2200 = vmatprep.subr.bf16.mxu0 0
        %2201 = vmatpush2.bf16.xpose.msra.mxu0 0
        %2202 = vmatprep.mubr.bf16.mxu0 0
        %2203 = vmatmul.mubr.bf16.gmra.mxu0 %v2162
        %v2204 = vpop.f32.mrf.mxu0
        %v2205 = vadd.f32 0.0, %v2204
        %v2206 = vpop.f32.mrf.mxu0
        %v2207 = vpop.f32.mrf.mxu0
        %v2208 = vadd.f32 0.0, %v2207
        %v2209 = vpop.f32.mrf.mxu0
        %2210 = vdwg.mxu0
        %v2211 = vld [vmem:[%s2153 + $0x4] sm:$0xf]
        %v2212 = vld [vmem:[%s2153 + $0x28] sm:$0xf]
        %v2213 = vld [vmem:[%s2153 + $0x10] sm:$0xf]
        %v2214 = vld [vmem:[%s2153 + $0x34] sm:$0xf]
        %v2217 = vunpack.c.l.b16 %v2211
        %v2218 = vunpack.c.l.b16 %v2212
        %v2219 = vpack.c.b16 %v2218, %v2217
        %v2223 = vunpack.c.l.b16 %v2213
        %v2224 = vunpack.c.l.b16 %v2214
        %v2225 = vpack.c.b16 %v2224, %v2223
        %2227 = vmatprep.subr.bf16.mxu0 0
        %2228 = vmatpush1.bf16.xpose.msra.mxu0 0
        %2229 = vmatprep.subr.bf16.mxu0 0
        %2230 = vmatpush1.bf16.xpose.msra.mxu0 0
        %2231 = vmatprep.subr.bf16.mxu0 0
        %2232 = vmatpush1.bf16.xpose.msra.mxu0 0
        %2233 = vmatprep.subr.bf16.mxu0 0
        %2234 = vmatpush1.bf16.xpose.msra.mxu0 0
        %2235 = vmatprep.subr.bf16.mxu0 0
        %2236 = vmatpush1.bf16.xpose.msra.mxu0 0
        %2237 = vmatprep.subr.bf16.mxu0 0
        %2238 = vmatpush1.bf16.xpose.msra.mxu0 0
        %2239 = vmatprep.subr.bf16.mxu0 0
        %2240 = vmatpush1.bf16.xpose.msra.mxu0 0
        %2241 = vmatprep.subr.bf16.mxu0 0
        %2242 = vmatpush1.bf16.xpose.msra.mxu0 %v2225
        %2243 = vmatprep.subr.bf16.mxu0 0
        %2244 = vmatpush2.bf16.xpose.msra.mxu0 0
        %2245 = vmatprep.subr.bf16.mxu0 0
        %2246 = vmatpush2.bf16.xpose.msra.mxu0 0
        %2247 = vmatprep.subr.bf16.mxu0 0
        %2248 = vmatpush2.bf16.xpose.msra.mxu0 0
        %2249 = vmatprep.subr.bf16.mxu0 0
        %2250 = vmatpush2.bf16.xpose.msra.mxu0 0
        %2251 = vmatprep.subr.bf16.mxu0 0
        %2252 = vmatpush2.bf16.xpose.msra.mxu0 0
        %2253 = vmatprep.subr.bf16.mxu0 0
        %2254 = vmatpush2.bf16.xpose.msra.mxu0 0
        %2255 = vmatprep.subr.bf16.mxu0 0
        %2256 = vmatpush2.bf16.xpose.msra.mxu0 0
        %2257 = vmatprep.subr.bf16.mxu0 0
        %2258 = vmatpush2.bf16.xpose.msra.mxu0 0
        %2259 = vmatprep.mubr.bf16.mxu0 0
        %2260 = vmatmul.mubr.bf16.gmra.mxu0 %v2219
        %v2261 = vpop.f32.mrf.mxu0
        %v2262 = vadd.f32 0.0, %v2261
        %v2263 = vpop.f32.mrf.mxu0
        %v2264 = vpop.f32.mrf.mxu0
        %v2265 = vadd.f32 0.0, %v2264
        %v2266 = vpop.f32.mrf.mxu0
        %2267 = vdwg.mxu0
        %v2268 = vld [vmem:[%s2153 + $0x8] sm:$0xf]
        %v2269 = vld [vmem:[%s2153 + $0x2c] sm:$0xf]
        %v2270 = vld [vmem:[%s2153 + $0x14] sm:$0xf]
        %v2271 = vld [vmem:[%s2153 + $0x38] sm:$0xf]
        %v2274 = vunpack.c.l.b16 %v2268
        %v2275 = vunpack.c.l.b16 %v2269
        %v2276 = vpack.c.b16 %v2275, %v2274
        %v2280 = vunpack.c.l.b16 %v2270
        %v2281 = vunpack.c.l.b16 %v2271
        %v2282 = vpack.c.b16 %v2281, %v2280
        %2284 = vmatprep.subr.bf16.mxu0 0
        %2285 = vmatpush1.bf16.xpose.msra.mxu0 0
        %2286 = vmatprep.subr.bf16.mxu0 0
        %2287 = vmatpush1.bf16.xpose.msra.mxu0 0
        %2288 = vmatprep.subr.bf16.mxu0 0
        %2289 = vmatpush1.bf16.xpose.msra.mxu0 0
        %2290 = vmatprep.subr.bf16.mxu0 0
        %2291 = vmatpush1.bf16.xpose.msra.mxu0 0
        %2292 = vmatprep.subr.bf16.mxu0 0
        %2293 = vmatpush1.bf16.xpose.msra.mxu0 0
        %2294 = vmatprep.subr.bf16.mxu0 0
        %2295 = vmatpush1.bf16.xpose.msra.mxu0 0
        %2296 = vmatprep.subr.bf16.mxu0 0
        %2297 = vmatpush1.bf16.xpose.msra.mxu0 0
        %2298 = vmatprep.subr.bf16.mxu0 0
        %2299 = vmatpush1.bf16.xpose.msra.mxu0 %v2282
        %2300 = vmatprep.subr.bf16.mxu0 0
        %2301 = vmatpush2.bf16.xpose.msra.mxu0 0
        %2302 = vmatprep.subr.bf16.mxu0 0
        %2303 = vmatpush2.bf16.xpose.msra.mxu0 0
        %2304 = vmatprep.subr.bf16.mxu0 0
        %2305 = vmatpush2.bf16.xpose.msra.mxu0 0
        %2306 = vmatprep.subr.bf16.mxu0 0
        %2307 = vmatpush2.bf16.xpose.msra.mxu0 0
        %2308 = vmatprep.subr.bf16.mxu0 0
        %2309 = vmatpush2.bf16.xpose.msra.mxu0 0
        %2310 = vmatprep.subr.bf16.mxu0 0
        %2311 = vmatpush2.bf16.xpose.msra.mxu0 0
        %2312 = vmatprep.subr.bf16.mxu0 0
        %2313 = vmatpush2.bf16.xpose.msra.mxu0 0
        %2314 = vmatprep.subr.bf16.mxu0 0
        %2315 = vmatpush2.bf16.xpose.msra.mxu0 0
        %2316 = vmatprep.mubr.bf16.mxu0 0
        %2317 = vmatmul.mubr.bf16.gmra.mxu0 %v2276
        %v2318 = vpop.f32.mrf.mxu0
        %v2319 = vadd.f32 0.0, %v2318
        %v2320 = vpop.f32.mrf.mxu0
        %v2321 = vpop.f32.mrf.mxu0
        %v2322 = vadd.f32 0.0, %v2321
        %v2323 = vpop.f32.mrf.mxu0
        %2324 = vdwg.mxu0
        %v2325 = vadd.f32 %v2205, %v2149
        %v2326 = vadd.f32 %v2208, %v2150
        %v2327 = vadd.f32 %v2262, %v2149
        %v2328 = vadd.f32 %v2265, %v2150
        %v2329 = vadd.f32 %v2319, %v2149
        %v2330 = vadd.f32 %v2322, %v2150
        %vm2331 = vcmask 130048
        %v2332 = vsel %vm2331, %v2325, -inf
        %2333 = vmax.xlane.f32.xlu0 %v2332
        %v2334 = vpop.xlane.xlu0 %2333
        %v2335 = vsel %vm2331, %v2326, -inf
        %2336 = vmax.xlane.f32.xlu0 %v2335
        %v2337 = vpop.xlane.xlu0 %2336
        %v2338 = vsel %vm2331, %v2327, -inf
        %2339 = vmax.xlane.f32.xlu0 %v2338
        %v2340 = vpop.xlane.xlu0 %2339
        %v2341 = vsel %vm2331, %v2328, -inf
        %2342 = vmax.xlane.f32.xlu0 %v2341
        %v2343 = vpop.xlane.xlu0 %2342
        %v2344 = vsel %vm2331, %v2329, -inf
        %2345 = vmax.xlane.f32.xlu0 %v2344
        %v2346 = vpop.xlane.xlu0 %2345
        %v2347 = vsel %vm2331, %v2330, -inf
        %2348 = vmax.xlane.f32.xlu0 %v2347
        %v2349 = vpop.xlane.xlu0 %2348
        %v2350 = vsub.f32 %v2325, %v2334
        %v2351 = vsub.f32 %v2326, %v2337
        %v2352 = vsub.f32 %v2327, %v2340
        %v2353 = vsub.f32 %v2328, %v2343
        %v2354 = vsub.f32 %v2329, %v2346
        %v2355 = vsub.f32 %v2330, %v2349
        %v2356 = vmul.f32 %v2350, 1.442695
        %v2357 = vpow.pop %v2356
        %v2358 = vmul.f32 %v2351, 1.442695
        %v2359 = vpow.pop %v2358
        %v2360 = vmul.f32 %v2352, 1.442695
        %v2361 = vpow.pop %v2360
        %v2362 = vmul.f32 %v2353, 1.442695
        %v2363 = vpow.pop %v2362
        %v2364 = vmul.f32 %v2354, 1.442695
        %v2365 = vpow.pop %v2364
        %v2366 = vmul.f32 %v2355, 1.442695
        %v2367 = vpow.pop %v2366
        %v2368 = vsel %vm2331, %v2357, 0.0
        %2369 = vadd.xlane.f32.xlu0 %v2368
        %v2370 = vpop.xlane.xlu0 %2369
        %v2371 = vsel %vm2331, %v2359, 0.0
        %2372 = vadd.xlane.f32.xlu0 %v2371
        %v2373 = vpop.xlane.xlu0 %2372
        %v2374 = vsel %vm2331, %v2361, 0.0
        %2375 = vadd.xlane.f32.xlu0 %v2374
        %v2376 = vpop.xlane.xlu0 %2375
        %v2377 = vsel %vm2331, %v2363, 0.0
        %2378 = vadd.xlane.f32.xlu0 %v2377
        %v2379 = vpop.xlane.xlu0 %2378
        %v2380 = vsel %vm2331, %v2365, 0.0
        %2381 = vadd.xlane.f32.xlu0 %v2380
        %v2382 = vpop.xlane.xlu0 %2381
        %v2383 = vsel %vm2331, %v2367, 0.0
        %2384 = vadd.xlane.f32.xlu0 %v2383
        %v2385 = vpop.xlane.xlu0 %2384
        %v2386 = vrcp.pop %v2370
        %v2387 = vrcp.pop %v2373
        %v2388 = vrcp.pop %v2376
        %v2389 = vrcp.pop %v2379
        %v2390 = vrcp.pop %v2382
        %v2391 = vrcp.pop %v2385
        %v2392 = vmul.f32 %v2357, %v2386
        %v2393 = vmul.f32 %v2359, %v2387
        %v2394 = vmul.f32 %v2361, %v2388
        %v2395 = vmul.f32 %v2363, %v2389
        %v2396 = vmul.f32 %v2365, %v2390
        %v2397 = vmul.f32 %v2367, %v2391
        %v2398 = vpack.c.bf16 %v2393, %v2392
        %v2399 = vpack.c.bf16 %v2395, %v2394
        %v2400 = vpack.c.bf16 %v2397, %v2396
        %v2401 = vld [vmem:[%s2153 + $0x18] sm:$0xf]
        %v2402 = vld [vmem:[%s2153 + $0x3c] sm:$0xf]
        %v2405 = vunpack.c.l.b16 %v2401
        %v2406 = vunpack.c.l.b16 %v2402
        %v2407 = vpack.c.b16 %v2406, %v2405
        %v2410 = vsel %vm2331, %v2398, 0
        %2412 = vmatprep.subr.bf16.mxu0 0
        %2413 = vmatpush1.bf16.msra.mxu0 0
        %2414 = vmatprep.subr.bf16.mxu0 0
        %2415 = vmatpush1.bf16.msra.mxu0 0
        %2416 = vmatprep.subr.bf16.mxu0 0
        %2417 = vmatpush1.bf16.msra.mxu0 0
        %2418 = vmatprep.subr.bf16.mxu0 0
        %2419 = vmatpush1.bf16.msra.mxu0 0
        %2420 = vmatprep.subr.bf16.mxu0 0
        %2421 = vmatpush1.bf16.msra.mxu0 0
        %2422 = vmatprep.subr.bf16.mxu0 0
        %2423 = vmatpush1.bf16.msra.mxu0 0
        %2424 = vmatprep.subr.bf16.mxu0 0
        %2425 = vmatpush1.bf16.msra.mxu0 0
        %2426 = vmatprep.subr.bf16.mxu0 0
        %2427 = vmatpush1.bf16.msra.mxu0 %v2407
        %2428 = vmatprep.subr.bf16.mxu0 0
        %2429 = vmatpush2.bf16.msra.mxu0 0
        %2430 = vmatprep.subr.bf16.mxu0 0
        %2431 = vmatpush2.bf16.msra.mxu0 0
        %2432 = vmatprep.subr.bf16.mxu0 0
        %2433 = vmatpush2.bf16.msra.mxu0 0
        %2434 = vmatprep.subr.bf16.mxu0 0
        %2435 = vmatpush2.bf16.msra.mxu0 0
        %2436 = vmatprep.subr.bf16.mxu0 0
        %2437 = vmatpush2.bf16.msra.mxu0 0
        %2438 = vmatprep.subr.bf16.mxu0 0
        %2439 = vmatpush2.bf16.msra.mxu0 0
        %2440 = vmatprep.subr.bf16.mxu0 0
        %2441 = vmatpush2.bf16.msra.mxu0 0
        %2442 = vmatprep.subr.bf16.mxu0 0
        %2443 = vmatpush2.bf16.msra.mxu0 0
        %2444 = vmatprep.mubr.bf16.mxu0 0
        %2445 = vmatmul.mubr.bf16.gmra.mxu0 %v2410
        %v2446 = vpop.f32.mrf.mxu0
        %v2447 = vadd.f32 0.0, %v2446
        %v2448 = vpop.f32.mrf.mxu0
        %v2449 = vpop.f32.mrf.mxu0
        %v2450 = vadd.f32 0.0, %v2449
        %v2451 = vpop.f32.mrf.mxu0
        %2452 = vdwg.mxu0
        %v2453 = vpack.c.bf16 %v2450, %v2447
        %v2455 = vunpack.c.l.b16 %v2453
        %v2456 = vunpack.c.h.b16 %v2453
        %v2457 = vpack.c.b16 %v2455, %v2455
        %v2458 = vpack.c.b16 %v2456, %v2456
        %s2461 = smul.u32 0, 3
        %s2462 = smul.addr %s2461, 4
        %s2463 = scalar_lea.vmem [#allocation3], %s2462
        %2464 = vst [vmem:[%s2463] sm:$0xf] %v2457
        %2465 = vst [vmem:[%s2463 + $0xc] sm:$0xf] %v2458
        %v2466 = vld [vmem:[%s2153 + $0x1c] sm:$0xf]
        %v2467 = vld [vmem:[%s2153 + $0x40] sm:$0xf]
        %v2470 = vunpack.c.l.b16 %v2466
        %v2471 = vunpack.c.l.b16 %v2467
        %v2472 = vpack.c.b16 %v2471, %v2470
        %v2475 = vsel %vm2331, %v2399, 0
        %2477 = vmatprep.subr.bf16.mxu0 0
        %2478 = vmatpush1.bf16.msra.mxu0 0
        %2479 = vmatprep.subr.bf16.mxu0 0
        %2480 = vmatpush1.bf16.msra.mxu0 0
        %2481 = vmatprep.subr.bf16.mxu0 0
        %2482 = vmatpush1.bf16.msra.mxu0 0
        %2483 = vmatprep.subr.bf16.mxu0 0
        %2484 = vmatpush1.bf16.msra.mxu0 0
        %2485 = vmatprep.subr.bf16.mxu0 0
        %2486 = vmatpush1.bf16.msra.mxu0 0
        %2487 = vmatprep.subr.bf16.mxu0 0
        %2488 = vmatpush1.bf16.msra.mxu0 0
        %2489 = vmatprep.subr.bf16.mxu0 0
        %2490 = vmatpush1.bf16.msra.mxu0 0
        %2491 = vmatprep.subr.bf16.mxu0 0
        %2492 = vmatpush1.bf16.msra.mxu0 %v2472
        %2493 = vmatprep.subr.bf16.mxu0 0
        %2494 = vmatpush2.bf16.msra.mxu0 0
        %2495 = vmatprep.subr.bf16.mxu0 0
        %2496 = vmatpush2.bf16.msra.mxu0 0
        %2497 = vmatprep.subr.bf16.mxu0 0
        %2498 = vmatpush2.bf16.msra.mxu0 0
        %2499 = vmatprep.subr.bf16.mxu0 0
        %2500 = vmatpush2.bf16.msra.mxu0 0
        %2501 = vmatprep.subr.bf16.mxu0 0
        %2502 = vmatpush2.bf16.msra.mxu0 0
        %2503 = vmatprep.subr.bf16.mxu0 0
        %2504 = vmatpush2.bf16.msra.mxu0 0
        %2505 = vmatprep.subr.bf16.mxu0 0
        %2506 = vmatpush2.bf16.msra.mxu0 0
        %2507 = vmatprep.subr.bf16.mxu0 0
        %2508 = vmatpush2.bf16.msra.mxu0 0
        %2509 = vmatprep.mubr.bf16.mxu0 0
        %2510 = vmatmul.mubr.bf16.gmra.mxu0 %v2475
        %v2511 = vpop.f32.mrf.mxu0
        %v2512 = vadd.f32 0.0, %v2511
        %v2513 = vpop.f32.mrf.mxu0
        %v2514 = vpop.f32.mrf.mxu0
        %v2515 = vadd.f32 0.0, %v2514
        %v2516 = vpop.f32.mrf.mxu0
        %2517 = vdwg.mxu0
        %v2518 = vpack.c.bf16 %v2515, %v2512
        %v2520 = vunpack.c.l.b16 %v2518
        %v2521 = vunpack.c.h.b16 %v2518
        %v2522 = vpack.c.b16 %v2520, %v2520
        %v2523 = vpack.c.b16 %v2521, %v2521
        %2526 = vst [vmem:[%s2463 + $0x4] sm:$0xf] %v2522
        %2527 = vst [vmem:[%s2463 + $0x10] sm:$0xf] %v2523
        %v2528 = vld [vmem:[%s2153 + $0x20] sm:$0xf]
        %v2529 = vld [vmem:[%s2153 + $0x44] sm:$0xf]
        %v2532 = vunpack.c.l.b16 %v2528
        %v2533 = vunpack.c.l.b16 %v2529
        %v2534 = vpack.c.b16 %v2533, %v2532
        %v2537 = vsel %vm2331, %v2400, 0
        %2539 = vmatprep.subr.bf16.mxu0 0
        %2540 = vmatpush1.bf16.msra.mxu0 0
        %2541 = vmatprep.subr.bf16.mxu0 0
        %2542 = vmatpush1.bf16.msra.mxu0 0
        %2543 = vmatprep.subr.bf16.mxu0 0
        %2544 = vmatpush1.bf16.msra.mxu0 0
        %2545 = vmatprep.subr.bf16.mxu0 0
        %2546 = vmatpush1.bf16.msra.mxu0 0
        %2547 = vmatprep.subr.bf16.mxu0 0
        %2548 = vmatpush1.bf16.msra.mxu0 0
        %2549 = vmatprep.subr.bf16.mxu0 0
        %2550 = vmatpush1.bf16.msra.mxu0 0
        %2551 = vmatprep.subr.bf16.mxu0 0
        %2552 = vmatpush1.bf16.msra.mxu0 0
        %2553 = vmatprep.subr.bf16.mxu0 0
        %2554 = vmatpush1.bf16.msra.mxu0 %v2534
        %2555 = vmatprep.subr.bf16.mxu0 0
        %2556 = vmatpush2.bf16.msra.mxu0 0
        %2557 = vmatprep.subr.bf16.mxu0 0
        %2558 = vmatpush2.bf16.msra.mxu0 0
        %2559 = vmatprep.subr.bf16.mxu0 0
        %2560 = vmatpush2.bf16.msra.mxu0 0
        %2561 = vmatprep.subr.bf16.mxu0 0
        %2562 = vmatpush2.bf16.msra.mxu0 0
        %2563 = vmatprep.subr.bf16.mxu0 0
        %2564 = vmatpush2.bf16.msra.mxu0 0
        %2565 = vmatprep.subr.bf16.mxu0 0
        %2566 = vmatpush2.bf16.msra.mxu0 0
        %2567 = vmatprep.subr.bf16.mxu0 0
        %2568 = vmatpush2.bf16.msra.mxu0 0
        %2569 = vmatprep.subr.bf16.mxu0 0
        %2570 = vmatpush2.bf16.msra.mxu0 0
        %2571 = vmatprep.mubr.bf16.mxu0 0
        %2572 = vmatmul.mubr.bf16.gmra.mxu0 %v2537
        %v2573 = vpop.f32.mrf.mxu0
        %v2574 = vadd.f32 0.0, %v2573
        %v2575 = vpop.f32.mrf.mxu0
        %v2576 = vpop.f32.mrf.mxu0
        %v2577 = vadd.f32 0.0, %v2576
        %v2578 = vpop.f32.mrf.mxu0
        %2579 = vdwg.mxu0
        %v2580 = vpack.c.bf16 %v2577, %v2574
        %v2582 = vunpack.c.l.b16 %v2580
        %v2583 = vunpack.c.h.b16 %v2580
        %v2584 = vpack.c.b16 %v2582, %v2582
        %v2585 = vpack.c.b16 %v2583, %v2583
        %2588 = vst [vmem:[%s2463 + $0x8] sm:$0xf] %v2584
        %2589 = vst [vmem:[%s2463 + $0x14] sm:$0xf] %v2585
        %v2590 = vld [vmem:[#allocation3] sm:$0xff]
        %v2591 = vld [vmem:[#allocation3 + $0x8] sm:$0xf]
        %v2592 = vld [vmem:[#allocation3 + $0xc] sm:$0xff]
        %v2593 = vld [vmem:[#allocation3 + $0x14] sm:$0xf]
        %v2594 = vld [vmem:[#allocation9] sm:$0xff]
        %v2595 = vld [vmem:[#allocation9 + $0x8] sm:$0xf]
        %v2596 = vld [vmem:[#allocation9 + $0xc] sm:$0xff]
        %v2597 = vld [vmem:[#allocation9 + $0x14] sm:$0xf]
        %v2598 = vld [vmem:[#allocation9 + $0x18] sm:$0xff]
        %v2599 = vld [vmem:[#allocation9 + $0x20] sm:$0xf]
        %v2600 = vld [vmem:[#allocation9 + $0x24] sm:$0xff]
        %v2601 = vld [vmem:[#allocation9 + $0x2c] sm:$0xf]
        %v2602 = vld [vmem:[#allocation9 + $0x30] sm:$0xff]
        %v2603 = vld [vmem:[#allocation9 + $0x38] sm:$0xf]
        %v2604 = vld [vmem:[#allocation9 + $0x3c] sm:$0xff]
        %v2605 = vld [vmem:[#allocation9 + $0x44] sm:$0xf]
        %v2606 = vld [vmem:[#allocation9 + $0x48] sm:$0xff]
        %v2607 = vld [vmem:[#allocation9 + $0x50] sm:$0xf]
        %v2608 = vld [vmem:[#allocation9 + $0x54] sm:$0xff]
        %v2609 = vld [vmem:[#allocation9 + $0x5c] sm:$0xf]
        %v2610 = vld [vmem:[#allocation9 + $0x60] sm:$0xff]
        %v2611 = vld [vmem:[#allocation9 + $0x68] sm:$0xf]
        %v2612 = vld [vmem:[#allocation9 + $0x6c] sm:$0xff]
        %v2613 = vld [vmem:[#allocation9 + $0x74] sm:$0xf]
        %v2614 = vld [vmem:[#allocation9 + $0x78] sm:$0xff]
        %v2615 = vld [vmem:[#allocation9 + $0x80] sm:$0xf]
        %v2616 = vld [vmem:[#allocation9 + $0x84] sm:$0xff]
        %v2617 = vld [vmem:[#allocation9 + $0x8c] sm:$0xf]
        %v2618 = vld [vmem:[#allocation9 + $0x90] sm:$0xff]
        %v2619 = vld [vmem:[#allocation9 + $0x98] sm:$0xf]
        %v2620 = vld [vmem:[#allocation9 + $0x9c] sm:$0xff]
        %v2621 = vld [vmem:[#allocation9 + $0xa4] sm:$0xf]
        %v2622 = vld [vmem:[#allocation9 + $0xa8] sm:$0xff]
        %v2623 = vld [vmem:[#allocation9 + $0xb0] sm:$0xf]
        %v2624 = vld [vmem:[#allocation9 + $0xb4] sm:$0xff]
        %v2625 = vld [vmem:[#allocation9 + $0xbc] sm:$0xf]
        %v2626 = vld [vmem:[#allocation9 + $0xc0] sm:$0xff]
        %v2627 = vld [vmem:[#allocation9 + $0xc8] sm:$0xf]
        %v2628 = vld [vmem:[#allocation9 + $0xcc] sm:$0xff]
        %v2629 = vld [vmem:[#allocation9 + $0xd4] sm:$0xf]
        %v2630 = vld [vmem:[#allocation9 + $0xd8] sm:$0xff]
        %v2631 = vld [vmem:[#allocation9 + $0xe0] sm:$0xf]
        %v2632 = vld [vmem:[#allocation9 + $0xe4] sm:$0xff]
        %v2633 = vld [vmem:[#allocation9 + $0xec] sm:$0xf]
        %v2634 = vld [vmem:[#allocation9 + $0xf0] sm:$0xff]
        %v2635 = vld [vmem:[#allocation9 + $0xf8] sm:$0xf]
        %v2636 = vld [vmem:[#allocation9 + $0xfc] sm:$0xff]
        %v2637 = vld [vmem:[#allocation9 + $0x104] sm:$0xf]
        %v2638 = vld [vmem:[#allocation9 + $0x108] sm:$0xff]
        %v2639 = vld [vmem:[#allocation9 + $0x110] sm:$0xf]
        %v2640 = vld [vmem:[#allocation9 + $0x114] sm:$0xff]
        %v2641 = vld [vmem:[#allocation9 + $0x11c] sm:$0xf]
        %v2642 = vld [vmem:[#allocation9 + $0x120] sm:$0xff]
        %v2643 = vld [vmem:[#allocation9 + $0x128] sm:$0xf]
        %v2644 = vld [vmem:[#allocation9 + $0x12c] sm:$0xff]
        %v2645 = vld [vmem:[#allocation9 + $0x134] sm:$0xf]
        %v2646 = vld [vmem:[#allocation9 + $0x138] sm:$0xff]
        %v2647 = vld [vmem:[#allocation9 + $0x140] sm:$0xf]
        %v2648 = vld [vmem:[#allocation9 + $0x144] sm:$0xff]
        %v2649 = vld [vmem:[#allocation9 + $0x14c] sm:$0xf]
        %v2650 = vld [vmem:[#allocation9 + $0x150] sm:$0xff]
        %v2651 = vld [vmem:[#allocation9 + $0x158] sm:$0xf]
        %v2652 = vld [vmem:[#allocation9 + $0x15c] sm:$0xff]
        %v2653 = vld [vmem:[#allocation9 + $0x164] sm:$0xf]
        %v2654 = vld [vmem:[#allocation9 + $0x168] sm:$0xff]
        %v2655 = vld [vmem:[#allocation9 + $0x170] sm:$0xf]
        %v2656 = vld [vmem:[#allocation9 + $0x174] sm:$0xff]
        %v2657 = vld [vmem:[#allocation9 + $0x17c] sm:$0xf]
        %v2658 = vld [vmem:[#allocation9 + $0x180] sm:$0xff]
        %v2659 = vld [vmem:[#allocation9 + $0x188] sm:$0xf]
        %v2660 = vld [vmem:[#allocation9 + $0x18c] sm:$0xff]
        %v2661 = vld [vmem:[#allocation9 + $0x194] sm:$0xf]
        %v2662 = vld [vmem:[#allocation9 + $0x198] sm:$0xff]
        %v2663 = vld [vmem:[#allocation9 + $0x1a0] sm:$0xf]
        %v2664 = vld [vmem:[#allocation9 + $0x1a4] sm:$0xff]
        %v2665 = vld [vmem:[#allocation9 + $0x1ac] sm:$0xf]
        %v2666 = vld [vmem:[#allocation9 + $0x1b0] sm:$0xff]
        %v2667 = vld [vmem:[#allocation9 + $0x1b8] sm:$0xf]
        %v2668 = vld [vmem:[#allocation9 + $0x1bc] sm:$0xff]
        %v2669 = vld [vmem:[#allocation9 + $0x1c4] sm:$0xf]
        %v2670 = vld [vmem:[#allocation9 + $0x1c8] sm:$0xff]
        %v2671 = vld [vmem:[#allocation9 + $0x1d0] sm:$0xf]
        %v2672 = vld [vmem:[#allocation9 + $0x1d4] sm:$0xff]
        %v2673 = vld [vmem:[#allocation9 + $0x1dc] sm:$0xf]
        %v2674 = vld [vmem:[#allocation9 + $0x1e0] sm:$0xff]
        %v2675 = vld [vmem:[#allocation9 + $0x1e8] sm:$0xf]
        %v2676 = vld [vmem:[#allocation9 + $0x1ec] sm:$0xff]
        %v2677 = vld [vmem:[#allocation9 + $0x1f4] sm:$0xf]
        %v2678 = vld [vmem:[#allocation9 + $0x1f8] sm:$0xff]
        %v2679 = vld [vmem:[#allocation9 + $0x200] sm:$0xf]
        %v2680 = vld [vmem:[#allocation9 + $0x204] sm:$0xff]
        %v2681 = vld [vmem:[#allocation9 + $0x20c] sm:$0xf]
        %v2682 = vld [vmem:[#allocation9 + $0x210] sm:$0xff]
        %v2683 = vld [vmem:[#allocation9 + $0x218] sm:$0xf]
        %v2684 = vld [vmem:[#allocation9 + $0x21c] sm:$0xff]
        %v2685 = vld [vmem:[#allocation9 + $0x224] sm:$0xf]
        %v2686 = vld [vmem:[#allocation9 + $0x228] sm:$0xff]
        %v2687 = vld [vmem:[#allocation9 + $0x230] sm:$0xf]
        %v2688 = vld [vmem:[#allocation9 + $0x234] sm:$0xff]
        %v2689 = vld [vmem:[#allocation9 + $0x23c] sm:$0xf]
        %v2694 = vunpack.c.l.b16 %v2590
        %v2695 = vunpack.c.h.b16 %v2590
        %v2696 = vunpack.c.l.b16 %v2591
        %v2697 = vunpack.c.l.b16 %v2592
        %v2698 = vunpack.c.h.b16 %v2592
        %v2699 = vunpack.c.l.b16 %v2593
        %v2700 = vpack.c.b16 %v2697, %v2694
        %v2701 = vpack.c.b16 %v2698, %v2695
        %v2702 = vpack.c.b16 %v2699, %v2696
        %v2802 = vunpack.c.l.b16 %v2594
        %v2803 = vunpack.c.h.b16 %v2594
        %v2804 = vunpack.c.l.b16 %v2595
        %v2805 = vunpack.c.l.b16 %v2596
        %v2806 = vunpack.c.h.b16 %v2596
        %v2807 = vunpack.c.l.b16 %v2597
        %v2808 = vunpack.c.l.b16 %v2598
        %v2809 = vunpack.c.h.b16 %v2598
        %v2810 = vunpack.c.l.b16 %v2599
        %v2811 = vunpack.c.l.b16 %v2600
        %v2812 = vunpack.c.h.b16 %v2600
        %v2813 = vunpack.c.l.b16 %v2601
        %v2814 = vunpack.c.l.b16 %v2602
        %v2815 = vunpack.c.h.b16 %v2602
        %v2816 = vunpack.c.l.b16 %v2603
        %v2817 = vunpack.c.l.b16 %v2604
        %v2818 = vunpack.c.h.b16 %v2604
        %v2819 = vunpack.c.l.b16 %v2605
        %v2820 = vunpack.c.l.b16 %v2606
        %v2821 = vunpack.c.h.b16 %v2606
        %v2822 = vunpack.c.l.b16 %v2607
        %v2823 = vunpack.c.l.b16 %v2608
        %v2824 = vunpack.c.h.b16 %v2608
        %v2825 = vunpack.c.l.b16 %v2609
        %v2826 = vunpack.c.l.b16 %v2610
        %v2827 = vunpack.c.h.b16 %v2610
        %v2828 = vunpack.c.l.b16 %v2611
        %v2829 = vunpack.c.l.b16 %v2612
        %v2830 = vunpack.c.h.b16 %v2612
        %v2831 = vunpack.c.l.b16 %v2613
        %v2832 = vunpack.c.l.b16 %v2614
        %v2833 = vunpack.c.h.b16 %v2614
        %v2834 = vunpack.c.l.b16 %v2615
        %v2835 = vunpack.c.l.b16 %v2616
        %v2836 = vunpack.c.h.b16 %v2616
        %v2837 = vunpack.c.l.b16 %v2617
        %v2838 = vunpack.c.l.b16 %v2618
        %v2839 = vunpack.c.h.b16 %v2618
        %v2840 = vunpack.c.l.b16 %v2619
        %v2841 = vunpack.c.l.b16 %v2620
        %v2842 = vunpack.c.h.b16 %v2620
        %v2843 = vunpack.c.l.b16 %v2621
        %v2844 = vunpack.c.l.b16 %v2622
        %v2845 = vunpack.c.h.b16 %v2622
        %v2846 = vunpack.c.l.b16 %v2623
        %v2847 = vunpack.c.l.b16 %v2624
        %v2848 = vunpack.c.h.b16 %v2624
        %v2849 = vunpack.c.l.b16 %v2625
        %v2850 = vunpack.c.l.b16 %v2626
        %v2851 = vunpack.c.h.b16 %v2626
        %v2852 = vunpack.c.l.b16 %v2627
        %v2853 = vunpack.c.l.b16 %v2628
        %v2854 = vunpack.c.h.b16 %v2628
        %v2855 = vunpack.c.l.b16 %v2629
        %v2856 = vunpack.c.l.b16 %v2630
        %v2857 = vunpack.c.h.b16 %v2630
        %v2858 = vunpack.c.l.b16 %v2631
        %v2859 = vunpack.c.l.b16 %v2632
        %v2860 = vunpack.c.h.b16 %v2632
        %v2861 = vunpack.c.l.b16 %v2633
        %v2862 = vunpack.c.l.b16 %v2634
        %v2863 = vunpack.c.h.b16 %v2634
        %v2864 = vunpack.c.l.b16 %v2635
        %v2865 = vunpack.c.l.b16 %v2636
        %v2866 = vunpack.c.h.b16 %v2636
        %v2867 = vunpack.c.l.b16 %v2637
        %v2868 = vunpack.c.l.b16 %v2638
        %v2869 = vunpack.c.h.b16 %v2638
        %v2870 = vunpack.c.l.b16 %v2639
        %v2871 = vunpack.c.l.b16 %v2640
        %v2872 = vunpack.c.h.b16 %v2640
        %v2873 = vunpack.c.l.b16 %v2641
        %v2874 = vunpack.c.l.b16 %v2642
        %v2875 = vunpack.c.h.b16 %v2642
        %v2876 = vunpack.c.l.b16 %v2643
        %v2877 = vunpack.c.l.b16 %v2644
        %v2878 = vunpack.c.h.b16 %v2644
        %v2879 = vunpack.c.l.b16 %v2645
        %v2880 = vunpack.c.l.b16 %v2646
        %v2881 = vunpack.c.h.b16 %v2646
        %v2882 = vunpack.c.l.b16 %v2647
        %v2883 = vunpack.c.l.b16 %v2648
        %v2884 = vunpack.c.h.b16 %v2648
        %v2885 = vunpack.c.l.b16 %v2649
        %v2886 = vunpack.c.l.b16 %v2650
        %v2887 = vunpack.c.h.b16 %v2650
        %v2888 = vunpack.c.l.b16 %v2651
        %v2889 = vunpack.c.l.b16 %v2652
        %v2890 = vunpack.c.h.b16 %v2652
        %v2891 = vunpack.c.l.b16 %v2653
        %v2892 = vunpack.c.l.b16 %v2654
        %v2893 = vunpack.c.h.b16 %v2654
        %v2894 = vunpack.c.l.b16 %v2655
        %v2895 = vunpack.c.l.b16 %v2656
        %v2896 = vunpack.c.h.b16 %v2656
        %v2897 = vunpack.c.l.b16 %v2657
        %v2898 = vunpack.c.l.b16 %v2658
        %v2899 = vunpack.c.h.b16 %v2658
        %v2900 = vunpack.c.l.b16 %v2659
        %v2901 = vunpack.c.l.b16 %v2660
        %v2902 = vunpack.c.h.b16 %v2660
        %v2903 = vunpack.c.l.b16 %v2661
        %v2904 = vunpack.c.l.b16 %v2662
        %v2905 = vunpack.c.h.b16 %v2662
        %v2906 = vunpack.c.l.b16 %v2663
        %v2907 = vunpack.c.l.b16 %v2664
        %v2908 = vunpack.c.h.b16 %v2664
        %v2909 = vunpack.c.l.b16 %v2665
        %v2910 = vunpack.c.l.b16 %v2666
        %v2911 = vunpack.c.h.b16 %v2666
        %v2912 = vunpack.c.l.b16 %v2667
        %v2913 = vunpack.c.l.b16 %v2668
        %v2914 = vunpack.c.h.b16 %v2668
        %v2915 = vunpack.c.l.b16 %v2669
        %v2916 = vunpack.c.l.b16 %v2670
        %v2917 = vunpack.c.h.b16 %v2670
        %v2918 = vunpack.c.l.b16 %v2671
        %v2919 = vunpack.c.l.b16 %v2672
        %v2920 = vunpack.c.h.b16 %v2672
        %v2921 = vunpack.c.l.b16 %v2673
        %v2922 = vunpack.c.l.b16 %v2674
        %v2923 = vunpack.c.h.b16 %v2674
        %v2924 = vunpack.c.l.b16 %v2675
        %v2925 = vunpack.c.l.b16 %v2676
        %v2926 = vunpack.c.h.b16 %v2676
        %v2927 = vunpack.c.l.b16 %v2677
        %v2928 = vunpack.c.l.b16 %v2678
        %v2929 = vunpack.c.h.b16 %v2678
        %v2930 = vunpack.c.l.b16 %v2679
        %v2931 = vunpack.c.l.b16 %v2680
        %v2932 = vunpack.c.h.b16 %v2680
        %v2933 = vunpack.c.l.b16 %v2681
        %v2934 = vunpack.c.l.b16 %v2682
        %v2935 = vunpack.c.h.b16 %v2682
        %v2936 = vunpack.c.l.b16 %v2683
        %v2937 = vunpack.c.l.b16 %v2684
        %v2938 = vunpack.c.h.b16 %v2684
        %v2939 = vunpack.c.l.b16 %v2685
        %v2940 = vunpack.c.l.b16 %v2686
        %v2941 = vunpack.c.h.b16 %v2686
        %v2942 = vunpack.c.l.b16 %v2687
        %v2943 = vunpack.c.l.b16 %v2688
        %v2944 = vunpack.c.h.b16 %v2688
        %v2945 = vunpack.c.l.b16 %v2689
        %v2946 = vpack.c.b16 %v2805, %v2802
        %v2947 = vpack.c.b16 %v2806, %v2803
        %v2948 = vpack.c.b16 %v2807, %v2804
        %v2949 = vpack.c.b16 %v2811, %v2808
        %v2950 = vpack.c.b16 %v2812, %v2809
        %v2951 = vpack.c.b16 %v2813, %v2810
        %v2952 = vpack.c.b16 %v2817, %v2814
        %v2953 = vpack.c.b16 %v2818, %v2815
        %v2954 = vpack.c.b16 %v2819, %v2816
        %v2955 = vpack.c.b16 %v2823, %v2820
        %v2956 = vpack.c.b16 %v2824, %v2821
        %v2957 = vpack.c.b16 %v2825, %v2822
        %v2958 = vpack.c.b16 %v2829, %v2826
        %v2959 = vpack.c.b16 %v2830, %v2827
        %v2960 = vpack.c.b16 %v2831, %v2828
        %v2961 = vpack.c.b16 %v2835, %v2832
        %v2962 = vpack.c.b16 %v2836, %v2833
        %v2963 = vpack.c.b16 %v2837, %v2834
        %v2964 = vpack.c.b16 %v2841, %v2838
        %v2965 = vpack.c.b16 %v2842, %v2839
        %v2966 = vpack.c.b16 %v2843, %v2840
        %v2967 = vpack.c.b16 %v2847, %v2844
        %v2968 = vpack.c.b16 %v2848, %v2845
        %v2969 = vpack.c.b16 %v2849, %v2846
        %v2970 = vpack.c.b16 %v2853, %v2850
        %v2971 = vpack.c.b16 %v2854, %v2851
        %v2972 = vpack.c.b16 %v2855, %v2852
        %v2973 = vpack.c.b16 %v2859, %v2856
        %v2974 = vpack.c.b16 %v2860, %v2857
        %v2975 = vpack.c.b16 %v2861, %v2858
        %v2976 = vpack.c.b16 %v2865, %v2862
        %v2977 = vpack.c.b16 %v2866, %v2863
        %v2978 = vpack.c.b16 %v2867, %v2864
        %v2979 = vpack.c.b16 %v2871, %v2868
        %v2980 = vpack.c.b16 %v2872, %v2869
        %v2981 = vpack.c.b16 %v2873, %v2870
        %v2982 = vpack.c.b16 %v2877, %v2874
        %v2983 = vpack.c.b16 %v2878, %v2875
        %v2984 = vpack.c.b16 %v2879, %v2876
        %v2985 = vpack.c.b16 %v2883, %v2880
        %v2986 = vpack.c.b16 %v2884, %v2881
        %v2987 = vpack.c.b16 %v2885, %v2882
        %v2988 = vpack.c.b16 %v2889, %v2886
        %v2989 = vpack.c.b16 %v2890, %v2887
        %v2990 = vpack.c.b16 %v2891, %v2888
        %v2991 = vpack.c.b16 %v2895, %v2892
        %v2992 = vpack.c.b16 %v2896, %v2893
        %v2993 = vpack.c.b16 %v2897, %v2894
        %v2994 = vpack.c.b16 %v2901, %v2898
        %v2995 = vpack.c.b16 %v2902, %v2899
        %v2996 = vpack.c.b16 %v2903, %v2900
        %v2997 = vpack.c.b16 %v2907, %v2904
        %v2998 = vpack.c.b16 %v2908, %v2905
        %v2999 = vpack.c.b16 %v2909, %v2906
        %v3000 = vpack.c.b16 %v2913, %v2910
        %v3001 = vpack.c.b16 %v2914, %v2911
        %v3002 = vpack.c.b16 %v2915, %v2912
        %v3003 = vpack.c.b16 %v2919, %v2916
        %v3004 = vpack.c.b16 %v2920, %v2917
        %v3005 = vpack.c.b16 %v2921, %v2918
        %v3006 = vpack.c.b16 %v2925, %v2922
        %v3007 = vpack.c.b16 %v2926, %v2923
        %v3008 = vpack.c.b16 %v2927, %v2924
        %v3009 = vpack.c.b16 %v2931, %v2928
        %v3010 = vpack.c.b16 %v2932, %v2929
        %v3011 = vpack.c.b16 %v2933, %v2930
        %v3012 = vpack.c.b16 %v2937, %v2934
        %v3013 = vpack.c.b16 %v2938, %v2935
        %v3014 = vpack.c.b16 %v2939, %v2936
        %v3015 = vpack.c.b16 %v2943, %v2940
        %v3016 = vpack.c.b16 %v2944, %v2941
        %v3017 = vpack.c.b16 %v2945, %v2942
        %3090 = vmatprep.subr.bf16.mxu0 %v2968
        %3091 = vmatpush1.bf16.msra.mxu0 %v2967
        %3092 = vmatprep.subr.bf16.mxu0 %v2965
        %3093 = vmatpush1.bf16.msra.mxu0 %v2964
        %3094 = vmatprep.subr.bf16.mxu0 %v2962
        %3095 = vmatpush1.bf16.msra.mxu0 %v2961
        %3096 = vmatprep.subr.bf16.mxu0 %v2959
        %3097 = vmatpush1.bf16.msra.mxu0 %v2958
        %3098 = vmatprep.subr.bf16.mxu0 %v2956
        %3099 = vmatpush1.bf16.msra.mxu0 %v2955
        %3100 = vmatprep.subr.bf16.mxu0 %v2953
        %3101 = vmatpush1.bf16.msra.mxu0 %v2952
        %3102 = vmatprep.subr.bf16.mxu0 %v2950
        %3103 = vmatpush1.bf16.msra.mxu0 %v2949
        %3104 = vmatprep.subr.bf16.mxu0 %v2947
        %3105 = vmatpush1.bf16.msra.mxu0 %v2946
        %3106 = vmatprep.subr.bf16.mxu0 %v2992
        %3107 = vmatpush2.bf16.msra.mxu0 %v2991
        %3108 = vmatprep.subr.bf16.mxu0 %v2989
        %3109 = vmatpush2.bf16.msra.mxu0 %v2988
        %3110 = vmatprep.subr.bf16.mxu0 %v2986
        %3111 = vmatpush2.bf16.msra.mxu0 %v2985
        %3112 = vmatprep.subr.bf16.mxu0 %v2983
        %3113 = vmatpush2.bf16.msra.mxu0 %v2982
        %3114 = vmatprep.subr.bf16.mxu0 %v2980
        %3115 = vmatpush2.bf16.msra.mxu0 %v2979
        %3116 = vmatprep.subr.bf16.mxu0 %v2977
        %3117 = vmatpush2.bf16.msra.mxu0 %v2976
        %3118 = vmatprep.subr.bf16.mxu0 %v2974
        %3119 = vmatpush2.bf16.msra.mxu0 %v2973
        %3120 = vmatprep.subr.bf16.mxu0 %v2971
        %3121 = vmatpush2.bf16.msra.mxu0 %v2970
        %3122 = vmatprep.mubr.bf16.mxu0 %v2701
        %3123 = vmatmul.mubr.bf16.gmra.mxu0 %v2700
        %v3124 = vpop.f32.mrf.mxu0
        %v3125 = vadd.f32 0.0, %v3124
        %v3126 = vpop.f32.mrf.mxu0
        %v3127 = vadd.f32 0.0, %v3126
        %v3128 = vpop.f32.mrf.mxu0
        %v3129 = vadd.f32 0.0, %v3128
        %v3130 = vpop.f32.mrf.mxu0
        %v3131 = vadd.f32 0.0, %v3130
        %3132 = vdwg.mxu0
        %3133 = vmatprep.subr.bf16.mxu0 %v3016
        %3134 = vmatpush1.bf16.msra.mxu0 %v3015
        %3135 = vmatprep.subr.bf16.mxu0 %v3013
        %3136 = vmatpush1.bf16.msra.mxu0 %v3012
        %3137 = vmatprep.subr.bf16.mxu0 %v3010
        %3138 = vmatpush1.bf16.msra.mxu0 %v3009
        %3139 = vmatprep.subr.bf16.mxu0 %v3007
        %3140 = vmatpush1.bf16.msra.mxu0 %v3006
        %3141 = vmatprep.subr.bf16.mxu0 %v3004
        %3142 = vmatpush1.bf16.msra.mxu0 %v3003
        %3143 = vmatprep.subr.bf16.mxu0 %v3001
        %3144 = vmatpush1.bf16.msra.mxu0 %v3000
        %3145 = vmatprep.subr.bf16.mxu0 %v2998
        %3146 = vmatpush1.bf16.msra.mxu0 %v2997
        %3147 = vmatprep.subr.bf16.mxu0 %v2995
        %3148 = vmatpush1.bf16.msra.mxu0 %v2994
        %3149 = vmatprep.subr.bf16.mxu0 0
        %3150 = vmatpush2.bf16.msra.mxu0 0
        %3151 = vmatprep.subr.bf16.mxu0 0
        %3152 = vmatpush2.bf16.msra.mxu0 0
        %3153 = vmatprep.subr.bf16.mxu0 0
        %3154 = vmatpush2.bf16.msra.mxu0 0
        %3155 = vmatprep.subr.bf16.mxu0 0
        %3156 = vmatpush2.bf16.msra.mxu0 0
        %3157 = vmatprep.subr.bf16.mxu0 0
        %3158 = vmatpush2.bf16.msra.mxu0 0
        %3159 = vmatprep.subr.bf16.mxu0 0
        %3160 = vmatpush2.bf16.msra.mxu0 0
        %3161 = vmatprep.subr.bf16.mxu0 0
        %3162 = vmatpush2.bf16.msra.mxu0 0
        %3163 = vmatprep.subr.bf16.mxu0 0
        %3164 = vmatpush2.bf16.msra.mxu0 0
        %3165 = vmatprep.mubr.bf16.mxu0 0
        %3166 = vmatmul.mubr.bf16.gmra.mxu0 %v2702
        %v3167 = vpop.f32.mrf.mxu0
        %v3168 = vadd.f32 %v3125, %v3167
        %v3169 = vpop.f32.mrf.mxu0
        %v3170 = vadd.f32 %v3127, %v3169
        %v3171 = vpop.f32.mrf.mxu0
        %v3172 = vadd.f32 %v3129, %v3171
        %v3173 = vpop.f32.mrf.mxu0
        %v3174 = vadd.f32 %v3131, %v3173
        %3175 = vdwg.mxu0
        %3176 = vmatprep.subr.bf16.mxu0 0
        %3177 = vmatpush1.bf16.msra.mxu0 %v2969
        %3178 = vmatprep.subr.bf16.mxu0 0
        %3179 = vmatpush1.bf16.msra.mxu0 %v2966
        %3180 = vmatprep.subr.bf16.mxu0 0
        %3181 = vmatpush1.bf16.msra.mxu0 %v2963
        %3182 = vmatprep.subr.bf16.mxu0 0
        %3183 = vmatpush1.bf16.msra.mxu0 %v2960
        %3184 = vmatprep.subr.bf16.mxu0 0
        %3185 = vmatpush1.bf16.msra.mxu0 %v2957
        %3186 = vmatprep.subr.bf16.mxu0 0
        %3187 = vmatpush1.bf16.msra.mxu0 %v2954
        %3188 = vmatprep.subr.bf16.mxu0 0
        %3189 = vmatpush1.bf16.msra.mxu0 %v2951
        %3190 = vmatprep.subr.bf16.mxu0 0
        %3191 = vmatpush1.bf16.msra.mxu0 %v2948
        %3192 = vmatprep.subr.bf16.mxu0 0
        %3193 = vmatpush2.bf16.msra.mxu0 %v2993
        %3194 = vmatprep.subr.bf16.mxu0 0
        %3195 = vmatpush2.bf16.msra.mxu0 %v2990
        %3196 = vmatprep.subr.bf16.mxu0 0
        %3197 = vmatpush2.bf16.msra.mxu0 %v2987
        %3198 = vmatprep.subr.bf16.mxu0 0
        %3199 = vmatpush2.bf16.msra.mxu0 %v2984
        %3200 = vmatprep.subr.bf16.mxu0 0
        %3201 = vmatpush2.bf16.msra.mxu0 %v2981
        %3202 = vmatprep.subr.bf16.mxu0 0
        %3203 = vmatpush2.bf16.msra.mxu0 %v2978
        %3204 = vmatprep.subr.bf16.mxu0 0
        %3205 = vmatpush2.bf16.msra.mxu0 %v2975
        %3206 = vmatprep.subr.bf16.mxu0 0
        %3207 = vmatpush2.bf16.msra.mxu0 %v2972
        %3208 = vmatprep.mubr.bf16.mxu0 %v2701
        %3209 = vmatmul.mubr.bf16.gmra.mxu0 %v2700
        %v3210 = vpop.f32.mrf.mxu0
        %v3211 = vadd.f32 0.0, %v3210
        %v3212 = vpop.f32.mrf.mxu0
        %v3213 = vpop.f32.mrf.mxu0
        %v3214 = vadd.f32 0.0, %v3213
        %v3215 = vpop.f32.mrf.mxu0
        %3216 = vdwg.mxu0
        %3217 = vmatprep.subr.bf16.mxu0 0
        %3218 = vmatpush1.bf16.msra.mxu0 %v3017
        %3219 = vmatprep.subr.bf16.mxu0 0
        %3220 = vmatpush1.bf16.msra.mxu0 %v3014
        %3221 = vmatprep.subr.bf16.mxu0 0
        %3222 = vmatpush1.bf16.msra.mxu0 %v3011
        %3223 = vmatprep.subr.bf16.mxu0 0
        %3224 = vmatpush1.bf16.msra.mxu0 %v3008
        %3225 = vmatprep.subr.bf16.mxu0 0
        %3226 = vmatpush1.bf16.msra.mxu0 %v3005
        %3227 = vmatprep.subr.bf16.mxu0 0
        %3228 = vmatpush1.bf16.msra.mxu0 %v3002
        %3229 = vmatprep.subr.bf16.mxu0 0
        %3230 = vmatpush1.bf16.msra.mxu0 %v2999
        %3231 = vmatprep.subr.bf16.mxu0 0
        %3232 = vmatpush1.bf16.msra.mxu0 %v2996
        %3233 = vmatprep.subr.bf16.mxu0 0
        %3234 = vmatpush2.bf16.msra.mxu0 0
        %3235 = vmatprep.subr.bf16.mxu0 0
        %3236 = vmatpush2.bf16.msra.mxu0 0
        %3237 = vmatprep.subr.bf16.mxu0 0
        %3238 = vmatpush2.bf16.msra.mxu0 0
        %3239 = vmatprep.subr.bf16.mxu0 0
        %3240 = vmatpush2.bf16.msra.mxu0 0
        %3241 = vmatprep.subr.bf16.mxu0 0
        %3242 = vmatpush2.bf16.msra.mxu0 0
        %3243 = vmatprep.subr.bf16.mxu0 0
        %3244 = vmatpush2.bf16.msra.mxu0 0
        %3245 = vmatprep.subr.bf16.mxu0 0
        %3246 = vmatpush2.bf16.msra.mxu0 0
        %3247 = vmatprep.subr.bf16.mxu0 0
        %3248 = vmatpush2.bf16.msra.mxu0 0
        %3249 = vmatprep.mubr.bf16.mxu0 0
        %3250 = vmatmul.mubr.bf16.gmra.mxu0 %v2702
        %v3251 = vpop.f32.mrf.mxu0
        %v3252 = vadd.f32 %v3211, %v3251
        %v3253 = vpop.f32.mrf.mxu0
        %v3254 = vpop.f32.mrf.mxu0
        %v3255 = vadd.f32 %v3214, %v3254
        %v3256 = vpop.f32.mrf.mxu0
        %3257 = vdwg.mxu0
        %v3258 = vld [vmem:[%s223] sm:$0xff]
        %v3259 = vld [vmem:[%s223 + $0x8] sm:$0xff]
        %v3260 = vld [vmem:[%s223 + $0x10] sm:$0xff]
        %v3261 = vld [vmem:[%s223 + $0x18] sm:$0xff]
        %v3262 = vld [vmem:[%s223 + $0x20] sm:$0xff]
        %v3263 = vld [vmem:[%s223 + $0x28] sm:$0xff]
        %v3264 = vadd.f32 %v3168, %v3258
        %v3265 = vadd.f32 %v3170, %v3259
        %v3266 = vadd.f32 %v3252, %v3260
        %v3267 = vadd.f32 %v3172, %v3261
        %v3268 = vadd.f32 %v3174, %v3262
        %v3269 = vadd.f32 %v3255, %v3263
        %3270 = vst [vmem:[%s259] sm:$0xff] %v3264
        %3271 = vst [vmem:[%s259 + $0x8] sm:$0xff] %v3265
        %3272 = vst [vmem:[%s259 + $0x10] sm:$0xff] %v3266
        %3273 = vst [vmem:[%s259 + $0x18] sm:$0xff] %v3267
        %3274 = vst [vmem:[%s259 + $0x20] sm:$0xff] %v3268
        %3275 = vst [vmem:[%s259 + $0x28] sm:$0xff] %v3269
        %s3276 = sand.u32 %s120, 1
        %s3277 = scalar_lea.sflag [#allocation6], %s3276
        %s3278 = sand.u32 %s120, 1
        %s3279 = smul.addr %s3278, 48
        %s3280 = scalar_lea.vmem [#allocation12], %s3279
        // Predicated region
        $region53: #{tpu_custom_call.1} parent=35 // pred_check
          %p3281 = pneg %p130
        $region54: #{tpu_custom_call.1} parent=35 // pred_check_branch
          %3283 = sbr.rel (%p3281) target = $region56
        $region55: #{tpu_custom_call.1} parent=35 // pred_region
          %s3285 = ssub.s32 768, 768
          %3286 = vsyncadd %s3277, %s3285
          %s3287 = smul.addr %s23, 6
          %s3288 = smul.addr %s3287, 128
          %s3289 = scalar_lea.hbm %s4, %s3288
          %s3290 = sshll.u32 %s3280, 4
          %s3291 = int_to_ptr.vmem [resolvable:$true] %s3290
          %3296 = dma.vmem_to_hbm [thread:$0]  %s3291, 768, %s3289, %s3277, 384, 384, 24
        $region56: #{tpu_custom_call.1} parent=35 // pred_fallthru
          _
      $region36: #{tpu_custom_call.1} parent=5 // pred_fallthru
        _
      %p3297 = scmp.le.s32.totalorder 2, %s18
      // Predicated region
      $region57: #{tpu_custom_call.1} parent=5 // pred_check
        %p3298 = pneg %p3297
      $region58: #{tpu_custom_call.1} parent=5 // pred_check_branch
        %3300 = sbr.rel (%p3298) target = $region60
      $region59: #{tpu_custom_call.1} parent=5 // pred_region
        %s3301 = ssub.s32 %s18, 2
        // Predicated region
        $region61: #{tpu_custom_call.1} parent=59 // pred_check
          %p3302 = pneg %p136
        $region62: #{tpu_custom_call.1} parent=59 // pred_check_branch
          %3304 = sbr.rel (%p3302) target = $region64
        $region63: #{tpu_custom_call.1} parent=59 // pred_region
          %s3305 = sand.u32 %s121, 1
          %s3306 = scalar_lea.sflag [#allocation6], %s3305
          %s3307 = sand.u32 %s121, 1
          %s3308 = smul.addr %s3307, 48
          %s3309 = scalar_lea.vmem [#allocation12], %s3308
          %3310 = dma.done %s3306, 768
        $region64: #{tpu_custom_call.1} parent=59 // pred_fallthru
          _
      $region60: #{tpu_custom_call.1} parent=5 // pred_fallthru
        _
    $region6: #{tpu_custom_call.1} parent=1 // loop_footer
      %s22 = sadd.s32 1, %s18
    $region7: #{tpu_custom_call.1} parent=1 // loop_footer_branch
      %17 = sbr.rel target = $region3
    $region8: #{tpu_custom_call.1} parent=1 // loop_exit
      _
    %3311 = vsyncpa [#allocation5], 1
    %s3312 = scalar_lea.sflag [#allocation5], 1
    %3313 = vsyncpa %s3312, 1
    %3314 = vsyncpa [#allocation8], 1
    %3315 = vsyncpa [#allocation11], 1
    %3316 = vsyncpa [#allocation6], 1
    %s3317 = scalar_lea.sflag [#allocation6], 1
    %3318 = vsyncpa %s3317, 1

</llo_original>
